<compile_context>
chip_gen: v7x
topology: tpu7x:2x2x1
jax: 0.10.0
libtpu: 0.0.40
codegen_flags: <defaults>
</compile_context>

<pallas_src>
import math

import jax
import jax.numpy as jnp
from jax.experimental import pallas as pl
from jax.experimental.pallas import tpu as pltpu


_LANE = 128
_SUBLANE = 8
_MAX_K_BLOCK = 2048  # stream K in <=2048-wide slabs (VMEM guard, esp. v7x)


def _round_up(x, m):
    return (x + m - 1) // m * m


# ----------------------------------------------------------------------------
# Fused kernel:  o = relu(x @ W1 + b1) @ W2 + b2
# Grid = (M tiles ["parallel"], K tiles ["arbitrary"]).  fc1 partial sums
# accumulate into an f32 VMEM scratch; ReLU + fc2 + biases run once on the
# last K step, so the (tm, 512) hidden activation never leaves VMEM.
# ----------------------------------------------------------------------------
def _fc_fused_kernel(x_ref, w1_ref, b1_ref, w2_ref, b2_ref, o_ref, h_acc):
    k = pl.program_id(1)

    @pl.when(k == 0)
    def _init():
        h_acc[...] = jnp.zeros_like(h_acc)

    # fc1 partial product for this K slab (f32 accumulation on the MXU).
    h_acc[...] += jnp.dot(x_ref[...], w1_ref[...],
                          preferred_element_type=jnp.float32)

    @pl.when(k == pl.num_programs(1) - 1)
    def _finalize():
        h = jnp.maximum(h_acc[...] + b1_ref[...], 0.0).astype(w2_ref.dtype)
        o = jnp.dot(h, w2_ref[...], preferred_element_type=jnp.float32)
        o_ref[...] = (o + b2_ref[...]).astype(o_ref.dtype)


# ----------------------------------------------------------------------------
# One-time parameter preparation (hoisted out of the forward path).
# ----------------------------------------------------------------------------
def prepare_params(params, *, use_bf16=False):
    """Pad weights/biases to lane-aligned shapes and (optionally) cast the MXU
    operands to bf16.  Call once and reuse; returns (prepared_dict, out_dim)."""
    w1, b1 = params["fc1_w"], params["fc1_b"]        # (K, 512), (512,)
    w2, b2 = params["out_w"], params["out_b"]        # (512, N), (N,)
    K, H = w1.shape
    N = w2.shape[1]

    K_pad = _round_up(K, _LANE)
    if K_pad > _MAX_K_BLOCK:                          # make the K slab size divide K_pad
        K_pad = _round_up(K_pad, _MAX_K_BLOCK)
    N_pad = _round_up(N, _LANE)

    mxu_dtype = jnp.bfloat16 if use_bf16 else jnp.float32
    prep = dict(
        w1=jnp.pad(w1, ((0, K_pad - K), (0, 0))).astype(mxu_dtype),
        b1=b1.reshape(1, H).astype(jnp.float32),
        w2=jnp.pad(w2, ((0, 0), (0, N_pad - N))).astype(mxu_dtype),
        b2=jnp.pad(b2, ((0, N_pad - N),)).reshape(1, N_pad).astype(jnp.float32),
    )
    return prep, N


# ----------------------------------------------------------------------------
# Forward wrapper: minimal per-call padding + gridded pallas_call.
# ----------------------------------------------------------------------------
def fc_representation_forward(x, prep, *, out_dim, tile_m=512):
    B = x.shape[0]
    x2 = x.reshape(B, -1)                             # x.view(batch, -1)
    K = x2.shape[1]

    w1, b1, w2, b2 = prep["w1"], prep["b1"], prep["w2"], prep["b2"]
    K_pad, H = w1.shape
    N_pad = w2.shape[1]
    assert K <= K_pad, "input feature dim exceeds prepared weight dim"
    mxu_dtype = w1.dtype
    itemsize = jnp.dtype(mxu_dtype).itemsize

    # M tiling: pad batch only to a sublane multiple; split into >=2 blocks when
    # the batch allows so the "parallel" axis can shard across v7x's 2 TCs.
    # Pallas masks the ragged last block, so B need not divide tm.
    M8 = _round_up(B, _SUBLANE)
    tm = min(tile_m, max(_SUBLANE, _round_up(pl.cdiv(B, 2), _SUBLANE)))
    m_tiles = pl.cdiv(M8, tm)

    # K tiling: single slab for small K, otherwise stream K (VMEM guard).
    tk = min(K_pad, _MAX_K_BLOCK)
    k_tiles = K_pad // tk

    # Only per-call data prep: tiny sublane/lane pad + optional bf16 cast of the
    # activation (fuses into one cheap XLA op; no weight work here).
    xp = x2
    if (M8, K_pad) != x2.shape:
        xp = jnp.pad(x2, ((0, M8 - B), (0, K_pad - K)))
    xp = xp.astype(mxu_dtype)

    # VMEM footprint: x & W1 double-buffered, W2/biases resident single-buffered,
    # output double-buffered, f32 accumulator scratch.
    vmem_bytes = (2 * tm * tk * itemsize
                  + (2 if k_tiles > 1 else 1) * tk * H * itemsize
                  + H * N_pad * itemsize
                  + 2 * tm * N_pad * 4
                  + tm * H * 4
                  + 2 * (H + N_pad) * 4)
    vmem_limit = int(min(96 * 1024 * 1024, max(32 * 1024 * 1024, 2 * vmem_bytes)))

    resident = pl.Buffered(1)   # constant index_map -> never re-fetched

    out = pl.pallas_call(
        _fc_fused_kernel,
        out_shape=jax.ShapeDtypeStruct((M8, N_pad), jnp.float32),
        grid_spec=pltpu.PrefetchScalarGridSpec(
            num_scalar_prefetch=0,
            grid=(m_tiles, k_tiles),
            in_specs=[
                pl.BlockSpec((tm, tk), lambda i, k: (i, k)),          # x tile (streamed)
                pl.BlockSpec((tk, H), lambda i, k: (k, 0)),           # W1 K-slab (streamed)
                pl.BlockSpec((1, H), lambda i, k: (0, 0),
                             pipeline_mode=resident),                  # b1 (resident)
                pl.BlockSpec((H, N_pad), lambda i, k: (0, 0),
                             pipeline_mode=resident),                  # W2 (resident)
                pl.BlockSpec((1, N_pad), lambda i, k: (0, 0),
                             pipeline_mode=resident),                  # b2 (resident)
            ],
            out_specs=pl.BlockSpec((tm, N_pad), lambda i, k: (i, 0)),
            scratch_shapes=[pltpu.VMEM((tm, H), jnp.float32)],
        ),
        compiler_params=pltpu.CompilerParams(
            dimension_semantics=("parallel", "arbitrary"),
            vmem_limit_bytes=vmem_limit,
        ),
    )(xp, w1, b1, w2, b2)

    return out[:B, :out_dim]


# ----------------------------------------------------------------------------
# Parameters (PyTorch nn.Linear default init: U(-1/sqrt(fan_in), 1/sqrt(fan_in)))
# stored transposed as (in, out) for the matmul.
# ----------------------------------------------------------------------------
def init_params(key, input_dim, hidden_dim):
    k1, k2, k3, k4 = jax.random.split(key, 4)
    s1 = 1.0 / math.sqrt(input_dim)
    s2 = 1.0 / math.sqrt(512)
    return dict(
        fc1_w=jax.random.uniform(k1, (input_dim, 512), jnp.float32, -s1, s1),
        fc1_b=jax.random.uniform(k2, (512,), jnp.float32, -s1, s1),
        out_w=jax.random.uniform(k3, (512, hidden_dim), jnp.float32, -s2, s2),
        out_b=jax.random.uniform(k4, (hidden_dim,), jnp.float32, -s2, s2),
    )


if __name__ == "__main__":
    key = jax.random.PRNGKey(0)
    kx, kp = jax.random.split(key)

    # batch=2, channels=4, spatial 16x16  ->  input_dim = 4*16*16 = 1024, hidden_dim = 32
    B, C, S, HID = 2, 4, 16, 32
    x = jax.random.normal(kx, (B, C, S, S), jnp.float32)
    params = init_params(kp, input_dim=C * S * S, hidden_dim=HID)

    # plain-JAX reference for numerical correctness
    xr = x.reshape(B, -1)
    ref = (jnp.maximum(xr @ params["fc1_w"] + params["fc1_b"], 0.0)
           @ params["out_w"] + params["out_b"])

    fwd = jax.jit(fc_representation_forward, static_argnames=("out_dim", "tile_m"))

    # --- exact-numerics path (f32 MXU operands, matches PyTorch semantics) ---
    prep32, n_out = prepare_params(params, use_bf16=False)
    y = jax.block_until_ready(fwd(x, prep32, out_dim=n_out))
    assert y.shape == (B, HID), y.shape
    assert y.dtype == jnp.float32
    assert bool(jnp.all(jnp.isfinite(y)))
    assert bool(jnp.allclose(y, ref, atol=1e-4, rtol=1e-4)), float(jnp.max(jnp.abs(y - ref)))

    # --- fast path (bf16 MXU operands, f32 accumulation): looser tolerance ---
    prep16, _ = prepare_params(params, use_bf16=True)
    y16 = jax.block_until_ready(fwd(x, prep16, out_dim=n_out))
    assert y16.shape == (B, HID)
    assert bool(jnp.all(jnp.isfinite(y16)))
    assert bool(jnp.allclose(y16, ref, atol=1e-1, rtol=1e-1)), float(jnp.max(jnp.abs(y16 - ref)))

    print("KERNEL_OK")
</pallas_src>

<mosaic_0001>
module attributes {stable_mosaic.version = 11 : i64} {
  func.func @_fc_fused_kernel(%arg0: i32, %arg1: i32, %arg2: memref<8x1024xf32, #tpu.memory_space<vmem>>, %arg3: memref<1024x512xf32, #tpu.memory_space<vmem>>, %arg4: memref<1x512xf32, #tpu.memory_space<vmem>>, %arg5: memref<512x128xf32, #tpu.memory_space<vmem>>, %arg6: memref<1x128xf32, #tpu.memory_space<vmem>>, %arg7: memref<8x128xf32, #tpu.memory_space<vmem>>, %arg8: memref<8x512xf32, #tpu.memory_space<vmem>>) attributes {dimension_semantics = [#tpu.dimension_semantics<parallel>, #tpu.dimension_semantics<arbitrary>], iteration_bounds = array<i64: 1, 1>, scalar_prefetch = 0 : i64, scratch_operands = 1 : i64, tpu.core_type = #tpu.core_type<tc>, window_params = [{transform_indices = @transform_0, window_bounds = array<i64: 8, 1024>}, {transform_indices = @transform_1, window_bounds = array<i64: 1024, 512>}, {pipeline_mode = #tpu.pipeline_mode<synchronous>, transform_indices = @transform_2, window_bounds = array<i64: 1, 512>}, {pipeline_mode = #tpu.pipeline_mode<synchronous>, transform_indices = @transform_3, window_bounds = array<i64: 512, 128>}, {pipeline_mode = #tpu.pipeline_mode<synchronous>, transform_indices = @transform_4, window_bounds = array<i64: 1, 128>}, {transform_indices = @transform_5, window_bounds = array<i64: 8, 128>}]} {
    %c0_i32 = arith.constant 0 : i32
    %0 = arith.cmpi eq, %arg1, %c0_i32 : i32
    %1 = arith.extui %0 : i1 to i32
    %c0_i32_0 = arith.constant 0 : i32
    %2 = arith.cmpi ne, %1, %c0_i32_0 : i32
    scf.if %2 {
      %cst_10 = arith.constant 0.000000e+00 : f32
      %12 = vector.broadcast %cst_10 : f32 to vector<8x512xf32>
      %c0_11 = arith.constant 0 : index
      %c0_12 = arith.constant 0 : index
      %13 = vector.load %arg8[%c0_11, %c0_12] : memref<8x512xf32, #tpu.memory_space<vmem>>, vector<8x512xf32>
      tpu.vector_store %arg8[%c0_11, %c0_12], %12 {strides = array<i32>} : memref<8x512xf32, #tpu.memory_space<vmem>>, vector<8x512xf32>,
    } else {
    }
    %c0 = arith.constant 0 : index
    %c0_1 = arith.constant 0 : index
    %3 = vector.load %arg8[%c0, %c0_1] : memref<8x512xf32, #tpu.memory_space<vmem>>, vector<8x512xf32>
    %c0_2 = arith.constant 0 : index
    %c0_3 = arith.constant 0 : index
    %4 = vector.load %arg2[%c0_2, %c0_3] : memref<8x1024xf32, #tpu.memory_space<vmem>>, vector<8x1024xf32>
    %c0_4 = arith.constant 0 : index
    %c0_5 = arith.constant 0 : index
    %5 = vector.load %arg3[%c0_4, %c0_5] : memref<1024x512xf32, #tpu.memory_space<vmem>>, vector<1024x512xf32>
    %cst = arith.constant dense<0.000000e+00> : vector<8x512xf32>
    %6 = tpu.matmul %4, %5, %cst {dimension_numbers = #tpu.dot_dimension_numbers<[1], [0], [0], [1], [0, 0, 1, 1], [], []>} : vector<8x1024xf32>, vector<1024x512xf32>, vector<8x512xf32> -> vector<8x512xf32>
    %7 = arith.addf %3, %6 : vector<8x512xf32>
    %c0_6 = arith.constant 0 : index
    %c0_7 = arith.constant 0 : index
    %8 = vector.load %arg8[%c0_6, %c0_7] : memref<8x512xf32, #tpu.memory_space<vmem>>, vector<8x512xf32>
    tpu.vector_store %arg8[%c0_6, %c0_7], %7 {strides = array<i32>} : memref<8x512xf32, #tpu.memory_space<vmem>>, vector<8x512xf32>,
    %c0_i32_8 = arith.constant 0 : i32
    %9 = arith.cmpi eq, %arg1, %c0_i32_8 : i32
    %10 = arith.extui %9 : i1 to i32
    %c0_i32_9 = arith.constant 0 : i32
    %11 = arith.cmpi ne, %10, %c0_i32_9 : i32
    scf.if %11 {
      %c0_10 = arith.constant 0 : index
      %c0_11 = arith.constant 0 : index
      %12 = vector.load %arg8[%c0_10, %c0_11] : memref<8x512xf32, #tpu.memory_space<vmem>>, vector<8x512xf32>
      %c0_12 = arith.constant 0 : index
      %c0_13 = arith.constant 0 : index
      %13 = vector.load %arg4[%c0_12, %c0_13] : memref<1x512xf32, #tpu.memory_space<vmem>>, vector<1x512xf32>
      %14 = vector.broadcast %13 : vector<1x512xf32> to vector<8x512xf32>
      %15 = arith.addf %12, %14 : vector<8x512xf32>
      %cst_14 = arith.constant 0.000000e+00 : f32
      %16 = vector.broadcast %cst_14 : f32 to vector<8x512xf32>
      %17 = arith.maximumf %15, %16 : vector<8x512xf32>
      %c0_15 = arith.constant 0 : index
      %c0_16 = arith.constant 0 : index
      %18 = vector.load %arg5[%c0_15, %c0_16] : memref<512x128xf32, #tpu.memory_space<vmem>>, vector<512x128xf32>
      %cst_17 = arith.constant dense<0.000000e+00> : vector<8x128xf32>
      %19 = tpu.matmul %17, %18, %cst_17 {dimension_numbers = #tpu.dot_dimension_numbers<[1], [0], [0], [1], [0, 0, 1, 1], [], []>} : vector<8x512xf32>, vector<512x128xf32>, vector<8x128xf32> -> vector<8x128xf32>
      %c0_18 = arith.constant 0 : index
      %c0_19 = arith.constant 0 : index
      %20 = vector.load %arg6[%c0_18, %c0_19] : memref<1x128xf32, #tpu.memory_space<vmem>>, vector<1x128xf32>
      %21 = vector.broadcast %20 : vector<1x128xf32> to vector<8x128xf32>
      %22 = arith.addf %19, %21 : vector<8x128xf32>
      %c0_20 = arith.constant 0 : index
      %c0_21 = arith.constant 0 : index
      %23 = vector.load %arg7[%c0_20, %c0_21] : memref<8x128xf32, #tpu.memory_space<vmem>>, vector<8x128xf32>
      tpu.vector_store %arg7[%c0_20, %c0_21], %22 {strides = array<i32>} : memref<8x128xf32, #tpu.memory_space<vmem>>, vector<8x128xf32>,
    } else {
    }
    return
  }
  func.func @transform_0(%arg0: i32, %arg1: i32) -> (i32, i32) {
    %c0_i32 = arith.constant 0 : i32
    return %arg0, %arg1 : i32, i32
  }
  func.func @transform_1(%arg0: i32, %arg1: i32) -> (i32, i32) {
    %c0_i32 = arith.constant 0 : i32
    %c0_i32_0 = arith.constant 0 : i32
    return %arg1, %c0_i32 : i32, i32
  }
  func.func @transform_2(%arg0: i32, %arg1: i32) -> (i32, i32) {
    %c0_i32 = arith.constant 0 : i32
    %c0_i32_0 = arith.constant 0 : i32
    %c0_i32_1 = arith.constant 0 : i32
    return %c0_i32, %c0_i32_0 : i32, i32
  }
  func.func @transform_3(%arg0: i32, %arg1: i32) -> (i32, i32) {
    %c0_i32 = arith.constant 0 : i32
    %c0_i32_0 = arith.constant 0 : i32
    %c0_i32_1 = arith.constant 0 : i32
    return %c0_i32, %c0_i32_0 : i32, i32
  }
  func.func @transform_4(%arg0: i32, %arg1: i32) -> (i32, i32) {
    %c0_i32 = arith.constant 0 : i32
    %c0_i32_0 = arith.constant 0 : i32
    %c0_i32_1 = arith.constant 0 : i32
    return %c0_i32, %c0_i32_0 : i32, i32
  }
  func.func @transform_5(%arg0: i32, %arg1: i32) -> (i32, i32) {
    %c0_i32 = arith.constant 0 : i32
    %c0_i32_0 = arith.constant 0 : i32
    return %arg0, %c0_i32 : i32, i32
  }
}

</mosaic_0001>

<llo_original>
// kernel: fc_representation_forward.1
$region0: #{fc_representation_forward.1}
  #allocation0 [shape = 'u32[]', space=smem, size = 0x4, offset = 0x4, fixed_abs, tag = 'smem constant byte address 0x4 - core index']
  #allocation1 [shape = 'u32[144,128]{1,0:T(1,128)}', space=vmem, size = 0x12000, scoped, tag = 'internal scratch']
  #allocation2 [shape = 'f32[8,512]{1,0:T(8,128)}', space=vmem, size = 0x4000, scoped, tag = 'scratch operand']
  %s0 = inlined_call_operand.vmem [shape: f32[8,1024], index: 0, kind: input, shape index: {}]
  %s1 = inlined_call_operand.hbm [shape: f32[1024,512], index: 1, kind: input, shape index: {}]
  %s2 = inlined_call_operand.hbm [shape: f32[1,512], index: 2, kind: input, shape index: {}]
  %s3 = inlined_call_operand.hbm [shape: f32[512,128], index: 3, kind: input, shape index: {}]
  %s4 = inlined_call_operand.hbm [shape: f32[1,128], index: 4, kind: input, shape index: {}]
  %s5 = inlined_call_operand.vmem [shape: f32[8,128], index: 5, kind: output, shape index: {}]
  %s6 = sld [smem:[#allocation0]]
  $region54: #{fc_representation_forward.1} parent=0
    _
  %s8 = ssub.s32 1, %s6
  %s9 = scalar_select 0, %s8, %s6
  $region1: #{fc_representation_forward.1} parent=0
    #allocation3 [shape = 'u8[2097152]{0}', space=vmem, size = 0x200000, scoped, tag = 'input window, operand 1, single buffered']
    #allocation4 [shape = 's32[1]{0}', space=sflag, size = 0x4, scoped, tag = 'scoped memory for fc_representation_forward.1']
    #allocation5 [shape = 'u8[2048]{0}', space=vmem, size = 0x800, scoped, tag = 'input window, operand 2, single buffered']
    #allocation6 [shape = 's32[1]{0}', space=sflag, size = 0x4, scoped, tag = 'scoped memory for fc_representation_forward.1']
    #allocation7 [shape = 'u8[262144]{0}', space=vmem, size = 0x40000, scoped, tag = 'input window, operand 3, single buffered']
    #allocation8 [shape = 'u8[512]{0}', space=vmem, size = 0x400, scoped, tag = 'input window, operand 4, single buffered']
    #allocation9 [shape = 's32[1]{0}', space=sflag, size = 0x4, scoped, tag = 'scoped memory for fc_representation_forward.1']
    %10 = vsyncpa [#allocation4], 0
    %11 = vsyncpa [#allocation6], 0
    %12 = vsyncpa [#allocation9], 0
    // Predicated region
    $region2: #{fc_representation_forward.1} parent=1 // pred_check
      _
    $region3: #{fc_representation_forward.1} parent=1 // pred_check_branch
      %14 = sbr.rel (0) target = $region5
    $region4: #{fc_representation_forward.1} parent=1 // pred_region
      _
    $region5: #{fc_representation_forward.1} parent=1 // pred_fallthru
      _
    // Predicated region
    $region6: #{fc_representation_forward.1} parent=1 // pred_check
      _
    $region7: #{fc_representation_forward.1} parent=1 // pred_check_branch
      %16 = sbr.rel (0) target = $region9
    $region8: #{fc_representation_forward.1} parent=1 // pred_region
      %s18 = ssub.s32 65536, 65536
      %19 = vsyncadd [#allocation4], %s18
      %s20 = sshll.u32 [#allocation3], 4
      %s21 = int_to_ptr.vmem [resolvable:$true] %s20
      %26 = dma.hbm_to_vmem [thread:$0]  %s1, 65536, %s21, [#allocation4], 512, 512, 32
    $region9: #{fc_representation_forward.1} parent=1 // pred_fallthru
      _
    // Predicated region
    $region10: #{fc_representation_forward.1} parent=1 // pred_check
      _
    $region11: #{fc_representation_forward.1} parent=1 // pred_check_branch
      %28 = sbr.rel (0) target = $region13
    $region12: #{fc_representation_forward.1} parent=1 // pred_region
      %s30 = ssub.s32 64, 64
      %31 = vsyncadd [#allocation6], %s30
      %s33 = sshll.u32 [#allocation5], 4
      %s34 = int_to_ptr.vmem [resolvable:$true] %s33
      %36 = dma.hbm_to_vmem [thread:$0]  %s2, 64, %s34, [#allocation6]
    $region13: #{fc_representation_forward.1} parent=1 // pred_fallthru
      _
    // Predicated region
    $region14: #{fc_representation_forward.1} parent=1 // pred_check
      _
    $region15: #{fc_representation_forward.1} parent=1 // pred_check_branch
      %38 = sbr.rel (0) target = $region17
    $region16: #{fc_representation_forward.1} parent=1 // pred_region
      %s40 = ssub.s32 8192, 8192
      %41 = vsyncadd [#allocation6], %s40
      %s42 = sshll.u32 [#allocation7], 4
      %s43 = int_to_ptr.vmem [resolvable:$true] %s42
      %48 = dma.hbm_to_vmem [thread:$0]  %s3, 8192, %s43, [#allocation6], 128, 128, 8
    $region17: #{fc_representation_forward.1} parent=1 // pred_fallthru
      _
    // Predicated region
    $region18: #{fc_representation_forward.1} parent=1 // pred_check
      _
    $region19: #{fc_representation_forward.1} parent=1 // pred_check_branch
      %50 = sbr.rel (0) target = $region21
    $region20: #{fc_representation_forward.1} parent=1 // pred_region
      %s52 = ssub.s32 16, 16
      %53 = vsyncadd [#allocation9], %s52
      %s55 = sshll.u32 [#allocation8], 4
      %s56 = int_to_ptr.vmem [resolvable:$true] %s55
      %58 = dma.hbm_to_vmem [thread:$0]  %s4, 16, %s56, [#allocation9]
    $region21: #{fc_representation_forward.1} parent=1 // pred_fallthru
      _
    // Predicated region
    $region22: #{fc_representation_forward.1} parent=1 // pred_check
      _
    $region23: #{fc_representation_forward.1} parent=1 // pred_check_branch
      %60 = sbr.rel (0) target = $region25
    $region24: #{fc_representation_forward.1} parent=1 // pred_region
      %61 = dma.done [#allocation4], 65536
    $region25: #{fc_representation_forward.1} parent=1 // pred_fallthru
      _
    // Predicated region
    $region26: #{fc_representation_forward.1} parent=1 // pred_check
      _
    $region27: #{fc_representation_forward.1} parent=1 // pred_check_branch
      %63 = sbr.rel (0) target = $region29
    $region28: #{fc_representation_forward.1} parent=1 // pred_region
      %64 = dma.done [#allocation6], 64
    $region29: #{fc_representation_forward.1} parent=1 // pred_fallthru
      _
    // Predicated region
    $region30: #{fc_representation_forward.1} parent=1 // pred_check
      _
    $region31: #{fc_representation_forward.1} parent=1 // pred_check_branch
      %66 = sbr.rel (0) target = $region33
    $region32: #{fc_representation_forward.1} parent=1 // pred_region
      %67 = dma.done [#allocation6], 8192
    $region33: #{fc_representation_forward.1} parent=1 // pred_fallthru
      _
    // Predicated region
    $region34: #{fc_representation_forward.1} parent=1 // pred_check
      _
    $region35: #{fc_representation_forward.1} parent=1 // pred_check_branch
      %69 = sbr.rel (0) target = $region37
    $region36: #{fc_representation_forward.1} parent=1 // pred_region
      %70 = dma.done [#allocation9], 16
    $region37: #{fc_representation_forward.1} parent=1 // pred_fallthru
      _
    %p71 = scmp.eq.s32.totalorder 0, 0
    // Predicated region
    $region38: #{fc_representation_forward.1} parent=1 // pred_check
      %p72 = pneg %p71
    $region39: #{fc_representation_forward.1} parent=1 // pred_check_branch
      %74 = sbr.rel (%p72) target = $region41
    $region40: #{fc_representation_forward.1} parent=1 // pred_region
      %75 = vst [vmem:[#allocation2] sm:$0xff] 0.0
      %76 = vst [vmem:[#allocation2 + $0x8] sm:$0xff] 0.0
      %77 = vst [vmem:[#allocation2 + $0x10] sm:$0xff] 0.0
      %78 = vst [vmem:[#allocation2 + $0x18] sm:$0xff] 0.0
    $region41: #{fc_representation_forward.1} parent=1 // pred_fallthru
      _
    %v79 = vld [vmem:[#allocation2] sm:$0xff]
    %v80 = vld [vmem:[#allocation2 + $0x8] sm:$0xff]
    %v81 = vld [vmem:[#allocation2 + $0x10] sm:$0xff]
    %v82 = vld [vmem:[#allocation2 + $0x18] sm:$0xff]
    %v83 = vld [vmem:[%s0] sm:$0xff]
    %v84 = vld [vmem:[%s0 + $0x8] sm:$0xff]
    %v85 = vld [vmem:[%s0 + $0x10] sm:$0xff]
    %v86 = vld [vmem:[%s0 + $0x18] sm:$0xff]
    %v87 = vld [vmem:[%s0 + $0x20] sm:$0xff]
    %v88 = vld [vmem:[%s0 + $0x28] sm:$0xff]
    %v89 = vld [vmem:[%s0 + $0x30] sm:$0xff]
    %v90 = vld [vmem:[%s0 + $0x38] sm:$0xff]
    %v91 = vld [vmem:[#allocation3] sm:$0xff]
    %v92 = vld [vmem:[#allocation3 + $0x8] sm:$0xff]
    %v93 = vld [vmem:[#allocation3 + $0x10] sm:$0xff]
    %v94 = vld [vmem:[#allocation3 + $0x18] sm:$0xff]
    %v95 = vld [vmem:[#allocation3 + $0x20] sm:$0xff]
    %v96 = vld [vmem:[#allocation3 + $0x28] sm:$0xff]
    %v97 = vld [vmem:[#allocation3 + $0x30] sm:$0xff]
    %v98 = vld [vmem:[#allocation3 + $0x38] sm:$0xff]
    %v99 = vld [vmem:[#allocation3 + $0x40] sm:$0xff]
    %v100 = vld [vmem:[#allocation3 + $0x48] sm:$0xff]
    %v101 = vld [vmem:[#allocation3 + $0x50] sm:$0xff]
    %v102 = vld [vmem:[#allocation3 + $0x58] sm:$0xff]
    %v103 = vld [vmem:[#allocation3 + $0x60] sm:$0xff]
    %v104 = vld [vmem:[#allocation3 + $0x68] sm:$0xff]
    %v105 = vld [vmem:[#allocation3 + $0x70] sm:$0xff]
    %v106 = vld [vmem:[#allocation3 + $0x78] sm:$0xff]
    %v107 = vld [vmem:[#allocation3 + $0x80] sm:$0xff]
    %v108 = vld [vmem:[#allocation3 + $0x88] sm:$0xff]
    %v109 = vld [vmem:[#allocation3 + $0x90] sm:$0xff]
    %v110 = vld [vmem:[#allocation3 + $0x98] sm:$0xff]
    %v111 = vld [vmem:[#allocation3 + $0xa0] sm:$0xff]
    %v112 = vld [vmem:[#allocation3 + $0xa8] sm:$0xff]
    %v113 = vld [vmem:[#allocation3 + $0xb0] sm:$0xff]
    %v114 = vld [vmem:[#allocation3 + $0xb8] sm:$0xff]
    %v115 = vld [vmem:[#allocation3 + $0xc0] sm:$0xff]
    %v116 = vld [vmem:[#allocation3 + $0xc8] sm:$0xff]
    %v117 = vld [vmem:[#allocation3 + $0xd0] sm:$0xff]
    %v118 = vld [vmem:[#allocation3 + $0xd8] sm:$0xff]
    %v119 = vld [vmem:[#allocation3 + $0xe0] sm:$0xff]
    %v120 = vld [vmem:[#allocation3 + $0xe8] sm:$0xff]
    %v121 = vld [vmem:[#allocation3 + $0xf0] sm:$0xff]
    %v122 = vld [vmem:[#allocation3 + $0xf8] sm:$0xff]
    %v123 = vld [vmem:[#allocation3 + $0x100] sm:$0xff]
    %v124 = vld [vmem:[#allocation3 + $0x108] sm:$0xff]
    %v125 = vld [vmem:[#allocation3 + $0x110] sm:$0xff]
    %v126 = vld [vmem:[#allocation3 + $0x118] sm:$0xff]
    %v127 = vld [vmem:[#allocation3 + $0x120] sm:$0xff]
    %v128 = vld [vmem:[#allocation3 + $0x128] sm:$0xff]
    %v129 = vld [vmem:[#allocation3 + $0x130] sm:$0xff]
    %v130 = vld [vmem:[#allocation3 + $0x138] sm:$0xff]
    %v131 = vld [vmem:[#allocation3 + $0x140] sm:$0xff]
    %v132 = vld [vmem:[#allocation3 + $0x148] sm:$0xff]
    %v133 = vld [vmem:[#allocation3 + $0x150] sm:$0xff]
    %v134 = vld [vmem:[#allocation3 + $0x158] sm:$0xff]
    %v135 = vld [vmem:[#allocation3 + $0x160] sm:$0xff]
    %v136 = vld [vmem:[#allocation3 + $0x168] sm:$0xff]
    %v137 = vld [vmem:[#allocation3 + $0x170] sm:$0xff]
    %v138 = vld [vmem:[#allocation3 + $0x178] sm:$0xff]
    %v139 = vld [vmem:[#allocation3 + $0x180] sm:$0xff]
    %v140 = vld [vmem:[#allocation3 + $0x188] sm:$0xff]
    %v141 = vld [vmem:[#allocation3 + $0x190] sm:$0xff]
    %v142 = vld [vmem:[#allocation3 + $0x198] sm:$0xff]
    %v143 = vld [vmem:[#allocation3 + $0x1a0] sm:$0xff]
    %v144 = vld [vmem:[#allocation3 + $0x1a8] sm:$0xff]
    %v145 = vld [vmem:[#allocation3 + $0x1b0] sm:$0xff]
    %v146 = vld [vmem:[#allocation3 + $0x1b8] sm:$0xff]
    %v147 = vld [vmem:[#allocation3 + $0x1c0] sm:$0xff]
    %v148 = vld [vmem:[#allocation3 + $0x1c8] sm:$0xff]
    %v149 = vld [vmem:[#allocation3 + $0x1d0] sm:$0xff]
    %v150 = vld [vmem:[#allocation3 + $0x1d8] sm:$0xff]
    %v151 = vld [vmem:[#allocation3 + $0x1e0] sm:$0xff]
    %v152 = vld [vmem:[#allocation3 + $0x1e8] sm:$0xff]
    %v153 = vld [vmem:[#allocation3 + $0x1f0] sm:$0xff]
    %v154 = vld [vmem:[#allocation3 + $0x1f8] sm:$0xff]
    %v155 = vld [vmem:[#allocation3 + $0x200] sm:$0xff]
    %v156 = vld [vmem:[#allocation3 + $0x208] sm:$0xff]
    %v157 = vld [vmem:[#allocation3 + $0x210] sm:$0xff]
    %v158 = vld [vmem:[#allocation3 + $0x218] sm:$0xff]
    %v159 = vld [vmem:[#allocation3 + $0x220] sm:$0xff]
    %v160 = vld [vmem:[#allocation3 + $0x228] sm:$0xff]
    %v161 = vld [vmem:[#allocation3 + $0x230] sm:$0xff]
    %v162 = vld [vmem:[#allocation3 + $0x238] sm:$0xff]
    %v163 = vld [vmem:[#allocation3 + $0x240] sm:$0xff]
    %v164 = vld [vmem:[#allocation3 + $0x248] sm:$0xff]
    %v165 = vld [vmem:[#allocation3 + $0x250] sm:$0xff]
    %v166 = vld [vmem:[#allocation3 + $0x258] sm:$0xff]
    %v167 = vld [vmem:[#allocation3 + $0x260] sm:$0xff]
    %v168 = vld [vmem:[#allocation3 + $0x268] sm:$0xff]
    %v169 = vld [vmem:[#allocation3 + $0x270] sm:$0xff]
    %v170 = vld [vmem:[#allocation3 + $0x278] sm:$0xff]
    %v171 = vld [vmem:[#allocation3 + $0x280] sm:$0xff]
    %v172 = vld [vmem:[#allocation3 + $0x288] sm:$0xff]
    %v173 = vld [vmem:[#allocation3 + $0x290] sm:$0xff]
    %v174 = vld [vmem:[#allocation3 + $0x298] sm:$0xff]
    %v175 = vld [vmem:[#allocation3 + $0x2a0] sm:$0xff]
    %v176 = vld [vmem:[#allocation3 + $0x2a8] sm:$0xff]
    %v177 = vld [vmem:[#allocation3 + $0x2b0] sm:$0xff]
    %v178 = vld [vmem:[#allocation3 + $0x2b8] sm:$0xff]
    %v179 = vld [vmem:[#allocation3 + $0x2c0] sm:$0xff]
    %v180 = vld [vmem:[#allocation3 + $0x2c8] sm:$0xff]
    %v181 = vld [vmem:[#allocation3 + $0x2d0] sm:$0xff]
    %v182 = vld [vmem:[#allocation3 + $0x2d8] sm:$0xff]
    %v183 = vld [vmem:[#allocation3 + $0x2e0] sm:$0xff]
    %v184 = vld [vmem:[#allocation3 + $0x2e8] sm:$0xff]
    %v185 = vld [vmem:[#allocation3 + $0x2f0] sm:$0xff]
    %v186 = vld [vmem:[#allocation3 + $0x2f8] sm:$0xff]
    %v187 = vld [vmem:[#allocation3 + $0x300] sm:$0xff]
    %v188 = vld [vmem:[#allocation3 + $0x308] sm:$0xff]
    %v189 = vld [vmem:[#allocation3 + $0x310] sm:$0xff]
    %v190 = vld [vmem:[#allocation3 + $0x318] sm:$0xff]
    %v191 = vld [vmem:[#allocation3 + $0x320] sm:$0xff]
    %v192 = vld [vmem:[#allocation3 + $0x328] sm:$0xff]
    %v193 = vld [vmem:[#allocation3 + $0x330] sm:$0xff]
    %v194 = vld [vmem:[#allocation3 + $0x338] sm:$0xff]
    %v195 = vld [vmem:[#allocation3 + $0x340] sm:$0xff]
    %v196 = vld [vmem:[#allocation3 + $0x348] sm:$0xff]
    %v197 = vld [vmem:[#allocation3 + $0x350] sm:$0xff]
    %v198 = vld [vmem:[#allocation3 + $0x358] sm:$0xff]
    %v199 = vld [vmem:[#allocation3 + $0x360] sm:$0xff]
    %v200 = vld [vmem:[#allocation3 + $0x368] sm:$0xff]
    %v201 = vld [vmem:[#allocation3 + $0x370] sm:$0xff]
    %v202 = vld [vmem:[#allocation3 + $0x378] sm:$0xff]
    %v203 = vld [vmem:[#allocation3 + $0x380] sm:$0xff]
    %v204 = vld [vmem:[#allocation3 + $0x388] sm:$0xff]
    %v205 = vld [vmem:[#allocation3 + $0x390] sm:$0xff]
    %v206 = vld [vmem:[#allocation3 + $0x398] sm:$0xff]
    %v207 = vld [vmem:[#allocation3 + $0x3a0] sm:$0xff]
    %v208 = vld [vmem:[#allocation3 + $0x3a8] sm:$0xff]
    %v209 = vld [vmem:[#allocation3 + $0x3b0] sm:$0xff]
    %v210 = vld [vmem:[#allocation3 + $0x3b8] sm:$0xff]
    %v211 = vld [vmem:[#allocation3 + $0x3c0] sm:$0xff]
    %v212 = vld [vmem:[#allocation3 + $0x3c8] sm:$0xff]
    %v213 = vld [vmem:[#allocation3 + $0x3d0] sm:$0xff]
    %v214 = vld [vmem:[#allocation3 + $0x3d8] sm:$0xff]
    %v215 = vld [vmem:[#allocation3 + $0x3e0] sm:$0xff]
    %v216 = vld [vmem:[#allocation3 + $0x3e8] sm:$0xff]
    %v217 = vld [vmem:[#allocation3 + $0x3f0] sm:$0xff]
    %v218 = vld [vmem:[#allocation3 + $0x3f8] sm:$0xff]
    %v219 = vld [vmem:[#allocation3 + $0x400] sm:$0xff]
    %v220 = vld [vmem:[#allocation3 + $0x408] sm:$0xff]
    %v221 = vld [vmem:[#allocation3 + $0x410] sm:$0xff]
    %v222 = vld [vmem:[#allocation3 + $0x418] sm:$0xff]
    %v223 = vld [vmem:[#allocation3 + $0x420] sm:$0xff]
    %v224 = vld [vmem:[#allocation3 + $0x428] sm:$0xff]
    %v225 = vld [vmem:[#allocation3 + $0x430] sm:$0xff]
    %v226 = vld [vmem:[#allocation3 + $0x438] sm:$0xff]
    %v227 = vld [vmem:[#allocation3 + $0x440] sm:$0xff]
    %v228 = vld [vmem:[#allocation3 + $0x448] sm:$0xff]
    %v229 = vld [vmem:[#allocation3 + $0x450] sm:$0xff]
    %v230 = vld [vmem:[#allocation3 + $0x458] sm:$0xff]
    %v231 = vld [vmem:[#allocation3 + $0x460] sm:$0xff]
    %v232 = vld [vmem:[#allocation3 + $0x468] sm:$0xff]
    %v233 = vld [vmem:[#allocation3 + $0x470] sm:$0xff]
    %v234 = vld [vmem:[#allocation3 + $0x478] sm:$0xff]
    %v235 = vld [vmem:[#allocation3 + $0x480] sm:$0xff]
    %v236 = vld [vmem:[#allocation3 + $0x488] sm:$0xff]
    %v237 = vld [vmem:[#allocation3 + $0x490] sm:$0xff]
    %v238 = vld [vmem:[#allocation3 + $0x498] sm:$0xff]
    %v239 = vld [vmem:[#allocation3 + $0x4a0] sm:$0xff]
    %v240 = vld [vmem:[#allocation3 + $0x4a8] sm:$0xff]
    %v241 = vld [vmem:[#allocation3 + $0x4b0] sm:$0xff]
    %v242 = vld [vmem:[#allocation3 + $0x4b8] sm:$0xff]
    %v243 = vld [vmem:[#allocation3 + $0x4c0] sm:$0xff]
    %v244 = vld [vmem:[#allocation3 + $0x4c8] sm:$0xff]
    %v245 = vld [vmem:[#allocation3 + $0x4d0] sm:$0xff]
    %v246 = vld [vmem:[#allocation3 + $0x4d8] sm:$0xff]
    %v247 = vld [vmem:[#allocation3 + $0x4e0] sm:$0xff]
    %v248 = vld [vmem:[#allocation3 + $0x4e8] sm:$0xff]
    %v249 = vld [vmem:[#allocation3 + $0x4f0] sm:$0xff]
    %v250 = vld [vmem:[#allocation3 + $0x4f8] sm:$0xff]
    %v251 = vld [vmem:[#allocation3 + $0x500] sm:$0xff]
    %v252 = vld [vmem:[#allocation3 + $0x508] sm:$0xff]
    %v253 = vld [vmem:[#allocation3 + $0x510] sm:$0xff]
    %v254 = vld [vmem:[#allocation3 + $0x518] sm:$0xff]
    %v255 = vld [vmem:[#allocation3 + $0x520] sm:$0xff]
    %v256 = vld [vmem:[#allocation3 + $0x528] sm:$0xff]
    %v257 = vld [vmem:[#allocation3 + $0x530] sm:$0xff]
    %v258 = vld [vmem:[#allocation3 + $0x538] sm:$0xff]
    %v259 = vld [vmem:[#allocation3 + $0x540] sm:$0xff]
    %v260 = vld [vmem:[#allocation3 + $0x548] sm:$0xff]
    %v261 = vld [vmem:[#allocation3 + $0x550] sm:$0xff]
    %v262 = vld [vmem:[#allocation3 + $0x558] sm:$0xff]
    %v263 = vld [vmem:[#allocation3 + $0x560] sm:$0xff]
    %v264 = vld [vmem:[#allocation3 + $0x568] sm:$0xff]
    %v265 = vld [vmem:[#allocation3 + $0x570] sm:$0xff]
    %v266 = vld [vmem:[#allocation3 + $0x578] sm:$0xff]
    %v267 = vld [vmem:[#allocation3 + $0x580] sm:$0xff]
    %v268 = vld [vmem:[#allocation3 + $0x588] sm:$0xff]
    %v269 = vld [vmem:[#allocation3 + $0x590] sm:$0xff]
    %v270 = vld [vmem:[#allocation3 + $0x598] sm:$0xff]
    %v271 = vld [vmem:[#allocation3 + $0x5a0] sm:$0xff]
    %v272 = vld [vmem:[#allocation3 + $0x5a8] sm:$0xff]
    %v273 = vld [vmem:[#allocation3 + $0x5b0] sm:$0xff]
    %v274 = vld [vmem:[#allocation3 + $0x5b8] sm:$0xff]
    %v275 = vld [vmem:[#allocation3 + $0x5c0] sm:$0xff]
    %v276 = vld [vmem:[#allocation3 + $0x5c8] sm:$0xff]
    %v277 = vld [vmem:[#allocation3 + $0x5d0] sm:$0xff]
    %v278 = vld [vmem:[#allocation3 + $0x5d8] sm:$0xff]
    %v279 = vld [vmem:[#allocation3 + $0x5e0] sm:$0xff]
    %v280 = vld [vmem:[#allocation3 + $0x5e8] sm:$0xff]
    %v281 = vld [vmem:[#allocation3 + $0x5f0] sm:$0xff]
    %v282 = vld [vmem:[#allocation3 + $0x5f8] sm:$0xff]
    %v283 = vld [vmem:[#allocation3 + $0x600] sm:$0xff]
    %v284 = vld [vmem:[#allocation3 + $0x608] sm:$0xff]
    %v285 = vld [vmem:[#allocation3 + $0x610] sm:$0xff]
    %v286 = vld [vmem:[#allocation3 + $0x618] sm:$0xff]
    %v287 = vld [vmem:[#allocation3 + $0x620] sm:$0xff]
    %v288 = vld [vmem:[#allocation3 + $0x628] sm:$0xff]
    %v289 = vld [vmem:[#allocation3 + $0x630] sm:$0xff]
    %v290 = vld [vmem:[#allocation3 + $0x638] sm:$0xff]
    %v291 = vld [vmem:[#allocation3 + $0x640] sm:$0xff]
    %v292 = vld [vmem:[#allocation3 + $0x648] sm:$0xff]
    %v293 = vld [vmem:[#allocation3 + $0x650] sm:$0xff]
    %v294 = vld [vmem:[#allocation3 + $0x658] sm:$0xff]
    %v295 = vld [vmem:[#allocation3 + $0x660] sm:$0xff]
    %v296 = vld [vmem:[#allocation3 + $0x668] sm:$0xff]
    %v297 = vld [vmem:[#allocation3 + $0x670] sm:$0xff]
    %v298 = vld [vmem:[#allocation3 + $0x678] sm:$0xff]
    %v299 = vld [vmem:[#allocation3 + $0x680] sm:$0xff]
    %v300 = vld [vmem:[#allocation3 + $0x688] sm:$0xff]
    %v301 = vld [vmem:[#allocation3 + $0x690] sm:$0xff]
    %v302 = vld [vmem:[#allocation3 + $0x698] sm:$0xff]
    %v303 = vld [vmem:[#allocation3 + $0x6a0] sm:$0xff]
    %v304 = vld [vmem:[#allocation3 + $0x6a8] sm:$0xff]
    %v305 = vld [vmem:[#allocation3 + $0x6b0] sm:$0xff]
    %v306 = vld [vmem:[#allocation3 + $0x6b8] sm:$0xff]
    %v307 = vld [vmem:[#allocation3 + $0x6c0] sm:$0xff]
    %v308 = vld [vmem:[#allocation3 + $0x6c8] sm:$0xff]
    %v309 = vld [vmem:[#allocation3 + $0x6d0] sm:$0xff]
    %v310 = vld [vmem:[#allocation3 + $0x6d8] sm:$0xff]
    %v311 = vld [vmem:[#allocation3 + $0x6e0] sm:$0xff]
    %v312 = vld [vmem:[#allocation3 + $0x6e8] sm:$0xff]
    %v313 = vld [vmem:[#allocation3 + $0x6f0] sm:$0xff]
    %v314 = vld [vmem:[#allocation3 + $0x6f8] sm:$0xff]
    %v315 = vld [vmem:[#allocation3 + $0x700] sm:$0xff]
    %v316 = vld [vmem:[#allocation3 + $0x708] sm:$0xff]
    %v317 = vld [vmem:[#allocation3 + $0x710] sm:$0xff]
    %v318 = vld [vmem:[#allocation3 + $0x718] sm:$0xff]
    %v319 = vld [vmem:[#allocation3 + $0x720] sm:$0xff]
    %v320 = vld [vmem:[#allocation3 + $0x728] sm:$0xff]
    %v321 = vld [vmem:[#allocation3 + $0x730] sm:$0xff]
    %v322 = vld [vmem:[#allocation3 + $0x738] sm:$0xff]
    %v323 = vld [vmem:[#allocation3 + $0x740] sm:$0xff]
    %v324 = vld [vmem:[#allocation3 + $0x748] sm:$0xff]
    %v325 = vld [vmem:[#allocation3 + $0x750] sm:$0xff]
    %v326 = vld [vmem:[#allocation3 + $0x758] sm:$0xff]
    %v327 = vld [vmem:[#allocation3 + $0x760] sm:$0xff]
    %v328 = vld [vmem:[#allocation3 + $0x768] sm:$0xff]
    %v329 = vld [vmem:[#allocation3 + $0x770] sm:$0xff]
    %v330 = vld [vmem:[#allocation3 + $0x778] sm:$0xff]
    %v331 = vld [vmem:[#allocation3 + $0x780] sm:$0xff]
    %v332 = vld [vmem:[#allocation3 + $0x788] sm:$0xff]
    %v333 = vld [vmem:[#allocation3 + $0x790] sm:$0xff]
    %v334 = vld [vmem:[#allocation3 + $0x798] sm:$0xff]
    %v335 = vld [vmem:[#allocation3 + $0x7a0] sm:$0xff]
    %v336 = vld [vmem:[#allocation3 + $0x7a8] sm:$0xff]
    %v337 = vld [vmem:[#allocation3 + $0x7b0] sm:$0xff]
    %v338 = vld [vmem:[#allocation3 + $0x7b8] sm:$0xff]
    %v339 = vld [vmem:[#allocation3 + $0x7c0] sm:$0xff]
    %v340 = vld [vmem:[#allocation3 + $0x7c8] sm:$0xff]
    %v341 = vld [vmem:[#allocation3 + $0x7d0] sm:$0xff]
    %v342 = vld [vmem:[#allocation3 + $0x7d8] sm:$0xff]
    %v343 = vld [vmem:[#allocation3 + $0x7e0] sm:$0xff]
    %v344 = vld [vmem:[#allocation3 + $0x7e8] sm:$0xff]
    %v345 = vld [vmem:[#allocation3 + $0x7f0] sm:$0xff]
    %v346 = vld [vmem:[#allocation3 + $0x7f8] sm:$0xff]
    %v347 = vld [vmem:[#allocation3 + $0x800] sm:$0xff]
    %v348 = vld [vmem:[#allocation3 + $0x808] sm:$0xff]
    %v349 = vld [vmem:[#allocation3 + $0x810] sm:$0xff]
    %v350 = vld [vmem:[#allocation3 + $0x818] sm:$0xff]
    %v351 = vld [vmem:[#allocation3 + $0x820] sm:$0xff]
    %v352 = vld [vmem:[#allocation3 + $0x828] sm:$0xff]
    %v353 = vld [vmem:[#allocation3 + $0x830] sm:$0xff]
    %v354 = vld [vmem:[#allocation3 + $0x838] sm:$0xff]
    %v355 = vld [vmem:[#allocation3 + $0x840] sm:$0xff]
    %v356 = vld [vmem:[#allocation3 + $0x848] sm:$0xff]
    %v357 = vld [vmem:[#allocation3 + $0x850] sm:$0xff]
    %v358 = vld [vmem:[#allocation3 + $0x858] sm:$0xff]
    %v359 = vld [vmem:[#allocation3 + $0x860] sm:$0xff]
    %v360 = vld [vmem:[#allocation3 + $0x868] sm:$0xff]
    %v361 = vld [vmem:[#allocation3 + $0x870] sm:$0xff]
    %v362 = vld [vmem:[#allocation3 + $0x878] sm:$0xff]
    %v363 = vld [vmem:[#allocation3 + $0x880] sm:$0xff]
    %v364 = vld [vmem:[#allocation3 + $0x888] sm:$0xff]
    %v365 = vld [vmem:[#allocation3 + $0x890] sm:$0xff]
    %v366 = vld [vmem:[#allocation3 + $0x898] sm:$0xff]
    %v367 = vld [vmem:[#allocation3 + $0x8a0] sm:$0xff]
    %v368 = vld [vmem:[#allocation3 + $0x8a8] sm:$0xff]
    %v369 = vld [vmem:[#allocation3 + $0x8b0] sm:$0xff]
    %v370 = vld [vmem:[#allocation3 + $0x8b8] sm:$0xff]
    %v371 = vld [vmem:[#allocation3 + $0x8c0] sm:$0xff]
    %v372 = vld [vmem:[#allocation3 + $0x8c8] sm:$0xff]
    %v373 = vld [vmem:[#allocation3 + $0x8d0] sm:$0xff]
    %v374 = vld [vmem:[#allocation3 + $0x8d8] sm:$0xff]
    %v375 = vld [vmem:[#allocation3 + $0x8e0] sm:$0xff]
    %v376 = vld [vmem:[#allocation3 + $0x8e8] sm:$0xff]
    %v377 = vld [vmem:[#allocation3 + $0x8f0] sm:$0xff]
    %v378 = vld [vmem:[#allocation3 + $0x8f8] sm:$0xff]
    %v379 = vld [vmem:[#allocation3 + $0x900] sm:$0xff]
    %v380 = vld [vmem:[#allocation3 + $0x908] sm:$0xff]
    %v381 = vld [vmem:[#allocation3 + $0x910] sm:$0xff]
    %v382 = vld [vmem:[#allocation3 + $0x918] sm:$0xff]
    %v383 = vld [vmem:[#allocation3 + $0x920] sm:$0xff]
    %v384 = vld [vmem:[#allocation3 + $0x928] sm:$0xff]
    %v385 = vld [vmem:[#allocation3 + $0x930] sm:$0xff]
    %v386 = vld [vmem:[#allocation3 + $0x938] sm:$0xff]
    %v387 = vld [vmem:[#allocation3 + $0x940] sm:$0xff]
    %v388 = vld [vmem:[#allocation3 + $0x948] sm:$0xff]
    %v389 = vld [vmem:[#allocation3 + $0x950] sm:$0xff]
    %v390 = vld [vmem:[#allocation3 + $0x958] sm:$0xff]
    %v391 = vld [vmem:[#allocation3 + $0x960] sm:$0xff]
    %v392 = vld [vmem:[#allocation3 + $0x968] sm:$0xff]
    %v393 = vld [vmem:[#allocation3 + $0x970] sm:$0xff]
    %v394 = vld [vmem:[#allocation3 + $0x978] sm:$0xff]
    %v395 = vld [vmem:[#allocation3 + $0x980] sm:$0xff]
    %v396 = vld [vmem:[#allocation3 + $0x988] sm:$0xff]
    %v397 = vld [vmem:[#allocation3 + $0x990] sm:$0xff]
    %v398 = vld [vmem:[#allocation3 + $0x998] sm:$0xff]
    %v399 = vld [vmem:[#allocation3 + $0x9a0] sm:$0xff]
    %v400 = vld [vmem:[#allocation3 + $0x9a8] sm:$0xff]
    %v401 = vld [vmem:[#allocation3 + $0x9b0] sm:$0xff]
    %v402 = vld [vmem:[#allocation3 + $0x9b8] sm:$0xff]
    %v403 = vld [vmem:[#allocation3 + $0x9c0] sm:$0xff]
    %v404 = vld [vmem:[#allocation3 + $0x9c8] sm:$0xff]
    %v405 = vld [vmem:[#allocation3 + $0x9d0] sm:$0xff]
    %v406 = vld [vmem:[#allocation3 + $0x9d8] sm:$0xff]
    %v407 = vld [vmem:[#allocation3 + $0x9e0] sm:$0xff]
    %v408 = vld [vmem:[#allocation3 + $0x9e8] sm:$0xff]
    %v409 = vld [vmem:[#allocation3 + $0x9f0] sm:$0xff]
    %v410 = vld [vmem:[#allocation3 + $0x9f8] sm:$0xff]
    %v411 = vld [vmem:[#allocation3 + $0xa00] sm:$0xff]
    %v412 = vld [vmem:[#allocation3 + $0xa08] sm:$0xff]
    %v413 = vld [vmem:[#allocation3 + $0xa10] sm:$0xff]
    %v414 = vld [vmem:[#allocation3 + $0xa18] sm:$0xff]
    %v415 = vld [vmem:[#allocation3 + $0xa20] sm:$0xff]
    %v416 = vld [vmem:[#allocation3 + $0xa28] sm:$0xff]
    %v417 = vld [vmem:[#allocation3 + $0xa30] sm:$0xff]
    %v418 = vld [vmem:[#allocation3 + $0xa38] sm:$0xff]
    %v419 = vld [vmem:[#allocation3 + $0xa40] sm:$0xff]
    %v420 = vld [vmem:[#allocation3 + $0xa48] sm:$0xff]
    %v421 = vld [vmem:[#allocation3 + $0xa50] sm:$0xff]
    %v422 = vld [vmem:[#allocation3 + $0xa58] sm:$0xff]
    %v423 = vld [vmem:[#allocation3 + $0xa60] sm:$0xff]
    %v424 = vld [vmem:[#allocation3 + $0xa68] sm:$0xff]
    %v425 = vld [vmem:[#allocation3 + $0xa70] sm:$0xff]
    %v426 = vld [vmem:[#allocation3 + $0xa78] sm:$0xff]
    %v427 = vld [vmem:[#allocation3 + $0xa80] sm:$0xff]
    %v428 = vld [vmem:[#allocation3 + $0xa88] sm:$0xff]
    %v429 = vld [vmem:[#allocation3 + $0xa90] sm:$0xff]
    %v430 = vld [vmem:[#allocation3 + $0xa98] sm:$0xff]
    %v431 = vld [vmem:[#allocation3 + $0xaa0] sm:$0xff]
    %v432 = vld [vmem:[#allocation3 + $0xaa8] sm:$0xff]
    %v433 = vld [vmem:[#allocation3 + $0xab0] sm:$0xff]
    %v434 = vld [vmem:[#allocation3 + $0xab8] sm:$0xff]
    %v435 = vld [vmem:[#allocation3 + $0xac0] sm:$0xff]
    %v436 = vld [vmem:[#allocation3 + $0xac8] sm:$0xff]
    %v437 = vld [vmem:[#allocation3 + $0xad0] sm:$0xff]
    %v438 = vld [vmem:[#allocation3 + $0xad8] sm:$0xff]
    %v439 = vld [vmem:[#allocation3 + $0xae0] sm:$0xff]
    %v440 = vld [vmem:[#allocation3 + $0xae8] sm:$0xff]
    %v441 = vld [vmem:[#allocation3 + $0xaf0] sm:$0xff]
    %v442 = vld [vmem:[#allocation3 + $0xaf8] sm:$0xff]
    %v443 = vld [vmem:[#allocation3 + $0xb00] sm:$0xff]
    %v444 = vld [vmem:[#allocation3 + $0xb08] sm:$0xff]
    %v445 = vld [vmem:[#allocation3 + $0xb10] sm:$0xff]
    %v446 = vld [vmem:[#allocation3 + $0xb18] sm:$0xff]
    %v447 = vld [vmem:[#allocation3 + $0xb20] sm:$0xff]
    %v448 = vld [vmem:[#allocation3 + $0xb28] sm:$0xff]
    %v449 = vld [vmem:[#allocation3 + $0xb30] sm:$0xff]
    %v450 = vld [vmem:[#allocation3 + $0xb38] sm:$0xff]
    %v451 = vld [vmem:[#allocation3 + $0xb40] sm:$0xff]
    %v452 = vld [vmem:[#allocation3 + $0xb48] sm:$0xff]
    %v453 = vld [vmem:[#allocation3 + $0xb50] sm:$0xff]
    %v454 = vld [vmem:[#allocation3 + $0xb58] sm:$0xff]
    %v455 = vld [vmem:[#allocation3 + $0xb60] sm:$0xff]
    %v456 = vld [vmem:[#allocation3 + $0xb68] sm:$0xff]
    %v457 = vld [vmem:[#allocation3 + $0xb70] sm:$0xff]
    %v458 = vld [vmem:[#allocation3 + $0xb78] sm:$0xff]
    %v459 = vld [vmem:[#allocation3 + $0xb80] sm:$0xff]
    %v460 = vld [vmem:[#allocation3 + $0xb88] sm:$0xff]
    %v461 = vld [vmem:[#allocation3 + $0xb90] sm:$0xff]
    %v462 = vld [vmem:[#allocation3 + $0xb98] sm:$0xff]
    %v463 = vld [vmem:[#allocation3 + $0xba0] sm:$0xff]
    %v464 = vld [vmem:[#allocation3 + $0xba8] sm:$0xff]
    %v465 = vld [vmem:[#allocation3 + $0xbb0] sm:$0xff]
    %v466 = vld [vmem:[#allocation3 + $0xbb8] sm:$0xff]
    %v467 = vld [vmem:[#allocation3 + $0xbc0] sm:$0xff]
    %v468 = vld [vmem:[#allocation3 + $0xbc8] sm:$0xff]
    %v469 = vld [vmem:[#allocation3 + $0xbd0] sm:$0xff]
    %v470 = vld [vmem:[#allocation3 + $0xbd8] sm:$0xff]
    %v471 = vld [vmem:[#allocation3 + $0xbe0] sm:$0xff]
    %v472 = vld [vmem:[#allocation3 + $0xbe8] sm:$0xff]
    %v473 = vld [vmem:[#allocation3 + $0xbf0] sm:$0xff]
    %v474 = vld [vmem:[#allocation3 + $0xbf8] sm:$0xff]
    %v475 = vld [vmem:[#allocation3 + $0xc00] sm:$0xff]
    %v476 = vld [vmem:[#allocation3 + $0xc08] sm:$0xff]
    %v477 = vld [vmem:[#allocation3 + $0xc10] sm:$0xff]
    %v478 = vld [vmem:[#allocation3 + $0xc18] sm:$0xff]
    %v479 = vld [vmem:[#allocation3 + $0xc20] sm:$0xff]
    %v480 = vld [vmem:[#allocation3 + $0xc28] sm:$0xff]
    %v481 = vld [vmem:[#allocation3 + $0xc30] sm:$0xff]
    %v482 = vld [vmem:[#allocation3 + $0xc38] sm:$0xff]
    %v483 = vld [vmem:[#allocation3 + $0xc40] sm:$0xff]
    %v484 = vld [vmem:[#allocation3 + $0xc48] sm:$0xff]
    %v485 = vld [vmem:[#allocation3 + $0xc50] sm:$0xff]
    %v486 = vld [vmem:[#allocation3 + $0xc58] sm:$0xff]
    %v487 = vld [vmem:[#allocation3 + $0xc60] sm:$0xff]
    %v488 = vld [vmem:[#allocation3 + $0xc68] sm:$0xff]
    %v489 = vld [vmem:[#allocation3 + $0xc70] sm:$0xff]
    %v490 = vld [vmem:[#allocation3 + $0xc78] sm:$0xff]
    %v491 = vld [vmem:[#allocation3 + $0xc80] sm:$0xff]
    %v492 = vld [vmem:[#allocation3 + $0xc88] sm:$0xff]
    %v493 = vld [vmem:[#allocation3 + $0xc90] sm:$0xff]
    %v494 = vld [vmem:[#allocation3 + $0xc98] sm:$0xff]
    %v495 = vld [vmem:[#allocation3 + $0xca0] sm:$0xff]
    %v496 = vld [vmem:[#allocation3 + $0xca8] sm:$0xff]
    %v497 = vld [vmem:[#allocation3 + $0xcb0] sm:$0xff]
    %v498 = vld [vmem:[#allocation3 + $0xcb8] sm:$0xff]
    %v499 = vld [vmem:[#allocation3 + $0xcc0] sm:$0xff]
    %v500 = vld [vmem:[#allocation3 + $0xcc8] sm:$0xff]
    %v501 = vld [vmem:[#allocation3 + $0xcd0] sm:$0xff]
    %v502 = vld [vmem:[#allocation3 + $0xcd8] sm:$0xff]
    %v503 = vld [vmem:[#allocation3 + $0xce0] sm:$0xff]
    %v504 = vld [vmem:[#allocation3 + $0xce8] sm:$0xff]
    %v505 = vld [vmem:[#allocation3 + $0xcf0] sm:$0xff]
    %v506 = vld [vmem:[#allocation3 + $0xcf8] sm:$0xff]
    %v507 = vld [vmem:[#allocation3 + $0xd00] sm:$0xff]
    %v508 = vld [vmem:[#allocation3 + $0xd08] sm:$0xff]
    %v509 = vld [vmem:[#allocation3 + $0xd10] sm:$0xff]
    %v510 = vld [vmem:[#allocation3 + $0xd18] sm:$0xff]
    %v511 = vld [vmem:[#allocation3 + $0xd20] sm:$0xff]
    %v512 = vld [vmem:[#allocation3 + $0xd28] sm:$0xff]
    %v513 = vld [vmem:[#allocation3 + $0xd30] sm:$0xff]
    %v514 = vld [vmem:[#allocation3 + $0xd38] sm:$0xff]
    %v515 = vld [vmem:[#allocation3 + $0xd40] sm:$0xff]
    %v516 = vld [vmem:[#allocation3 + $0xd48] sm:$0xff]
    %v517 = vld [vmem:[#allocation3 + $0xd50] sm:$0xff]
    %v518 = vld [vmem:[#allocation3 + $0xd58] sm:$0xff]
    %v519 = vld [vmem:[#allocation3 + $0xd60] sm:$0xff]
    %v520 = vld [vmem:[#allocation3 + $0xd68] sm:$0xff]
    %v521 = vld [vmem:[#allocation3 + $0xd70] sm:$0xff]
    %v522 = vld [vmem:[#allocation3 + $0xd78] sm:$0xff]
    %v523 = vld [vmem:[#allocation3 + $0xd80] sm:$0xff]
    %v524 = vld [vmem:[#allocation3 + $0xd88] sm:$0xff]
    %v525 = vld [vmem:[#allocation3 + $0xd90] sm:$0xff]
    %v526 = vld [vmem:[#allocation3 + $0xd98] sm:$0xff]
    %v527 = vld [vmem:[#allocation3 + $0xda0] sm:$0xff]
    %v528 = vld [vmem:[#allocation3 + $0xda8] sm:$0xff]
    %v529 = vld [vmem:[#allocation3 + $0xdb0] sm:$0xff]
    %v530 = vld [vmem:[#allocation3 + $0xdb8] sm:$0xff]
    %v531 = vld [vmem:[#allocation3 + $0xdc0] sm:$0xff]
    %v532 = vld [vmem:[#allocation3 + $0xdc8] sm:$0xff]
    %v533 = vld [vmem:[#allocation3 + $0xdd0] sm:$0xff]
    %v534 = vld [vmem:[#allocation3 + $0xdd8] sm:$0xff]
    %v535 = vld [vmem:[#allocation3 + $0xde0] sm:$0xff]
    %v536 = vld [vmem:[#allocation3 + $0xde8] sm:$0xff]
    %v537 = vld [vmem:[#allocation3 + $0xdf0] sm:$0xff]
    %v538 = vld [vmem:[#allocation3 + $0xdf8] sm:$0xff]
    %v539 = vld [vmem:[#allocation3 + $0xe00] sm:$0xff]
    %v540 = vld [vmem:[#allocation3 + $0xe08] sm:$0xff]
    %v541 = vld [vmem:[#allocation3 + $0xe10] sm:$0xff]
    %v542 = vld [vmem:[#allocation3 + $0xe18] sm:$0xff]
    %v543 = vld [vmem:[#allocation3 + $0xe20] sm:$0xff]
    %v544 = vld [vmem:[#allocation3 + $0xe28] sm:$0xff]
    %v545 = vld [vmem:[#allocation3 + $0xe30] sm:$0xff]
    %v546 = vld [vmem:[#allocation3 + $0xe38] sm:$0xff]
    %v547 = vld [vmem:[#allocation3 + $0xe40] sm:$0xff]
    %v548 = vld [vmem:[#allocation3 + $0xe48] sm:$0xff]
    %v549 = vld [vmem:[#allocation3 + $0xe50] sm:$0xff]
    %v550 = vld [vmem:[#allocation3 + $0xe58] sm:$0xff]
    %v551 = vld [vmem:[#allocation3 + $0xe60] sm:$0xff]
    %v552 = vld [vmem:[#allocation3 + $0xe68] sm:$0xff]
    %v553 = vld [vmem:[#allocation3 + $0xe70] sm:$0xff]
    %v554 = vld [vmem:[#allocation3 + $0xe78] sm:$0xff]
    %v555 = vld [vmem:[#allocation3 + $0xe80] sm:$0xff]
    %v556 = vld [vmem:[#allocation3 + $0xe88] sm:$0xff]
    %v557 = vld [vmem:[#allocation3 + $0xe90] sm:$0xff]
    %v558 = vld [vmem:[#allocation3 + $0xe98] sm:$0xff]
    %v559 = vld [vmem:[#allocation3 + $0xea0] sm:$0xff]
    %v560 = vld [vmem:[#allocation3 + $0xea8] sm:$0xff]
    %v561 = vld [vmem:[#allocation3 + $0xeb0] sm:$0xff]
    %v562 = vld [vmem:[#allocation3 + $0xeb8] sm:$0xff]
    %v563 = vld [vmem:[#allocation3 + $0xec0] sm:$0xff]
    %v564 = vld [vmem:[#allocation3 + $0xec8] sm:$0xff]
    %v565 = vld [vmem:[#allocation3 + $0xed0] sm:$0xff]
    %v566 = vld [vmem:[#allocation3 + $0xed8] sm:$0xff]
    %v567 = vld [vmem:[#allocation3 + $0xee0] sm:$0xff]
    %v568 = vld [vmem:[#allocation3 + $0xee8] sm:$0xff]
    %v569 = vld [vmem:[#allocation3 + $0xef0] sm:$0xff]
    %v570 = vld [vmem:[#allocation3 + $0xef8] sm:$0xff]
    %v571 = vld [vmem:[#allocation3 + $0xf00] sm:$0xff]
    %v572 = vld [vmem:[#allocation3 + $0xf08] sm:$0xff]
    %v573 = vld [vmem:[#allocation3 + $0xf10] sm:$0xff]
    %v574 = vld [vmem:[#allocation3 + $0xf18] sm:$0xff]
    %v575 = vld [vmem:[#allocation3 + $0xf20] sm:$0xff]
    %v576 = vld [vmem:[#allocation3 + $0xf28] sm:$0xff]
    %v577 = vld [vmem:[#allocation3 + $0xf30] sm:$0xff]
    %v578 = vld [vmem:[#allocation3 + $0xf38] sm:$0xff]
    %v579 = vld [vmem:[#allocation3 + $0xf40] sm:$0xff]
    %v580 = vld [vmem:[#allocation3 + $0xf48] sm:$0xff]
    %v581 = vld [vmem:[#allocation3 + $0xf50] sm:$0xff]
    %v582 = vld [vmem:[#allocation3 + $0xf58] sm:$0xff]
    %v583 = vld [vmem:[#allocation3 + $0xf60] sm:$0xff]
    %v584 = vld [vmem:[#allocation3 + $0xf68] sm:$0xff]
    %v585 = vld [vmem:[#allocation3 + $0xf70] sm:$0xff]
    %v586 = vld [vmem:[#allocation3 + $0xf78] sm:$0xff]
    %v587 = vld [vmem:[#allocation3 + $0xf80] sm:$0xff]
    %v588 = vld [vmem:[#allocation3 + $0xf88] sm:$0xff]
    %v589 = vld [vmem:[#allocation3 + $0xf90] sm:$0xff]
    %v590 = vld [vmem:[#allocation3 + $0xf98] sm:$0xff]
    %v591 = vld [vmem:[#allocation3 + $0xfa0] sm:$0xff]
    %v592 = vld [vmem:[#allocation3 + $0xfa8] sm:$0xff]
    %v593 = vld [vmem:[#allocation3 + $0xfb0] sm:$0xff]
    %v594 = vld [vmem:[#allocation3 + $0xfb8] sm:$0xff]
    %v595 = vld [vmem:[#allocation3 + $0xfc0] sm:$0xff]
    %v596 = vld [vmem:[#allocation3 + $0xfc8] sm:$0xff]
    %v597 = vld [vmem:[#allocation3 + $0xfd0] sm:$0xff]
    %v598 = vld [vmem:[#allocation3 + $0xfd8] sm:$0xff]
    %v599 = vld [vmem:[#allocation3 + $0xfe0] sm:$0xff]
    %v600 = vld [vmem:[#allocation3 + $0xfe8] sm:$0xff]
    %v601 = vld [vmem:[#allocation3 + $0xff0] sm:$0xff]
    %v602 = vld [vmem:[#allocation3 + $0xff8] sm:$0xff]
    %603 = vmatprep.subr.mxu0 %v92
    %604 = vmatpush1.msra.mxu0 %v91
    %605 = vmatprep.subr.mxu0 %v96
    %606 = vmatpush1.msra.mxu0 %v95
    %607 = vmatprep.subr.mxu0 %v100
    %608 = vmatpush1.msra.mxu0 %v99
    %609 = vmatprep.subr.mxu0 %v104
    %610 = vmatpush1.msra.mxu0 %v103
    %611 = vmatprep.subr.mxu0 %v108
    %612 = vmatpush1.msra.mxu0 %v107
    %613 = vmatprep.subr.mxu0 %v112
    %614 = vmatpush1.msra.mxu0 %v111
    %615 = vmatprep.subr.mxu0 %v116
    %616 = vmatpush1.msra.mxu0 %v115
    %617 = vmatprep.subr.mxu0 %v120
    %618 = vmatpush1.msra.mxu0 %v119
    %619 = vmatprep.subr.mxu0 %v124
    %620 = vmatpush1.msra.mxu0 %v123
    %621 = vmatprep.subr.mxu0 %v128
    %622 = vmatpush1.msra.mxu0 %v127
    %623 = vmatprep.subr.mxu0 %v132
    %624 = vmatpush1.msra.mxu0 %v131
    %625 = vmatprep.subr.mxu0 %v136
    %626 = vmatpush1.msra.mxu0 %v135
    %627 = vmatprep.subr.mxu0 %v140
    %628 = vmatpush1.msra.mxu0 %v139
    %629 = vmatprep.subr.mxu0 %v144
    %630 = vmatpush1.msra.mxu0 %v143
    %631 = vmatprep.subr.mxu0 %v148
    %632 = vmatpush1.msra.mxu0 %v147
    %633 = vmatprep.subr.mxu0 %v152
    %634 = vmatpush1.msra.mxu0 %v151
    %635 = vmatprep.subr.mxu0 %v156
    %636 = vmatpush1.msra.mxu0 %v155
    %637 = vmatprep.subr.mxu0 %v160
    %638 = vmatpush1.msra.mxu0 %v159
    %639 = vmatprep.subr.mxu0 %v164
    %640 = vmatpush1.msra.mxu0 %v163
    %641 = vmatprep.subr.mxu0 %v168
    %642 = vmatpush1.msra.mxu0 %v167
    %643 = vmatprep.subr.mxu0 %v172
    %644 = vmatpush1.msra.mxu0 %v171
    %645 = vmatprep.subr.mxu0 %v176
    %646 = vmatpush1.msra.mxu0 %v175
    %647 = vmatprep.subr.mxu0 %v180
    %648 = vmatpush1.msra.mxu0 %v179
    %649 = vmatprep.subr.mxu0 %v184
    %650 = vmatpush1.msra.mxu0 %v183
    %651 = vmatprep.subr.mxu0 %v188
    %652 = vmatpush1.msra.mxu0 %v187
    %653 = vmatprep.subr.mxu0 %v192
    %654 = vmatpush1.msra.mxu0 %v191
    %655 = vmatprep.subr.mxu0 %v196
    %656 = vmatpush1.msra.mxu0 %v195
    %657 = vmatprep.subr.mxu0 %v200
    %658 = vmatpush1.msra.mxu0 %v199
    %659 = vmatprep.subr.mxu0 %v204
    %660 = vmatpush1.msra.mxu0 %v203
    %661 = vmatprep.subr.mxu0 %v208
    %662 = vmatpush1.msra.mxu0 %v207
    %663 = vmatprep.subr.mxu0 %v212
    %664 = vmatpush1.msra.mxu0 %v211
    %665 = vmatprep.subr.mxu0 %v216
    %666 = vmatpush1.msra.mxu0 %v215
    %667 = vmatprep.mubr.f32.mxu0 %v84
    %668 = vmatmul.mubr.f32.gmra.mrb[0].mxu0 %v83
    %v669 = vpop.f32.mrb[0].mxu0
    %v670 = vadd.f32 0.0, %v669
    %v671 = vpop.f32.mrb[0].mxu0
    %v672 = vadd.f32 0.0, %v671
    %673 = vdwg.mxu0
    %674 = vmatprep.subr.mxu0 %v220
    %675 = vmatpush1.msra.mxu0 %v219
    %676 = vmatprep.subr.mxu0 %v224
    %677 = vmatpush1.msra.mxu0 %v223
    %678 = vmatprep.subr.mxu0 %v228
    %679 = vmatpush1.msra.mxu0 %v227
    %680 = vmatprep.subr.mxu0 %v232
    %681 = vmatpush1.msra.mxu0 %v231
    %682 = vmatprep.subr.mxu0 %v236
    %683 = vmatpush1.msra.mxu0 %v235
    %684 = vmatprep.subr.mxu0 %v240
    %685 = vmatpush1.msra.mxu0 %v239
    %686 = vmatprep.subr.mxu0 %v244
    %687 = vmatpush1.msra.mxu0 %v243
    %688 = vmatprep.subr.mxu0 %v248
    %689 = vmatpush1.msra.mxu0 %v247
    %690 = vmatprep.subr.mxu0 %v252
    %691 = vmatpush1.msra.mxu0 %v251
    %692 = vmatprep.subr.mxu0 %v256
    %693 = vmatpush1.msra.mxu0 %v255
    %694 = vmatprep.subr.mxu0 %v260
    %695 = vmatpush1.msra.mxu0 %v259
    %696 = vmatprep.subr.mxu0 %v264
    %697 = vmatpush1.msra.mxu0 %v263
    %698 = vmatprep.subr.mxu0 %v268
    %699 = vmatpush1.msra.mxu0 %v267
    %700 = vmatprep.subr.mxu0 %v272
    %701 = vmatpush1.msra.mxu0 %v271
    %702 = vmatprep.subr.mxu0 %v276
    %703 = vmatpush1.msra.mxu0 %v275
    %704 = vmatprep.subr.mxu0 %v280
    %705 = vmatpush1.msra.mxu0 %v279
    %706 = vmatprep.subr.mxu0 %v284
    %707 = vmatpush1.msra.mxu0 %v283
    %708 = vmatprep.subr.mxu0 %v288
    %709 = vmatpush1.msra.mxu0 %v287
    %710 = vmatprep.subr.mxu0 %v292
    %711 = vmatpush1.msra.mxu0 %v291
    %712 = vmatprep.subr.mxu0 %v296
    %713 = vmatpush1.msra.mxu0 %v295
    %714 = vmatprep.subr.mxu0 %v300
    %715 = vmatpush1.msra.mxu0 %v299
    %716 = vmatprep.subr.mxu0 %v304
    %717 = vmatpush1.msra.mxu0 %v303
    %718 = vmatprep.subr.mxu0 %v308
    %719 = vmatpush1.msra.mxu0 %v307
    %720 = vmatprep.subr.mxu0 %v312
    %721 = vmatpush1.msra.mxu0 %v311
    %722 = vmatprep.subr.mxu0 %v316
    %723 = vmatpush1.msra.mxu0 %v315
    %724 = vmatprep.subr.mxu0 %v320
    %725 = vmatpush1.msra.mxu0 %v319
    %726 = vmatprep.subr.mxu0 %v324
    %727 = vmatpush1.msra.mxu0 %v323
    %728 = vmatprep.subr.mxu0 %v328
    %729 = vmatpush1.msra.mxu0 %v327
    %730 = vmatprep.subr.mxu0 %v332
    %731 = vmatpush1.msra.mxu0 %v331
    %732 = vmatprep.subr.mxu0 %v336
    %733 = vmatpush1.msra.mxu0 %v335
    %734 = vmatprep.subr.mxu0 %v340
    %735 = vmatpush1.msra.mxu0 %v339
    %736 = vmatprep.subr.mxu0 %v344
    %737 = vmatpush1.msra.mxu0 %v343
    %738 = vmatprep.mubr.f32.mxu0 %v86
    %739 = vmatmul.mubr.f32.gmra.mrb[0].mxu0 %v85
    %v740 = vpop.f32.mrb[0].mxu0
    %v741 = vadd.f32 %v670, %v740
    %v742 = vpop.f32.mrb[0].mxu0
    %v743 = vadd.f32 %v672, %v742
    %744 = vdwg.mxu0
    %745 = vmatprep.subr.mxu0 %v348
    %746 = vmatpush1.msra.mxu0 %v347
    %747 = vmatprep.subr.mxu0 %v352
    %748 = vmatpush1.msra.mxu0 %v351
    %749 = vmatprep.subr.mxu0 %v356
    %750 = vmatpush1.msra.mxu0 %v355
    %751 = vmatprep.subr.mxu0 %v360
    %752 = vmatpush1.msra.mxu0 %v359
    %753 = vmatprep.subr.mxu0 %v364
    %754 = vmatpush1.msra.mxu0 %v363
    %755 = vmatprep.subr.mxu0 %v368
    %756 = vmatpush1.msra.mxu0 %v367
    %757 = vmatprep.subr.mxu0 %v372
    %758 = vmatpush1.msra.mxu0 %v371
    %759 = vmatprep.subr.mxu0 %v376
    %760 = vmatpush1.msra.mxu0 %v375
    %761 = vmatprep.subr.mxu0 %v380
    %762 = vmatpush1.msra.mxu0 %v379
    %763 = vmatprep.subr.mxu0 %v384
    %764 = vmatpush1.msra.mxu0 %v383
    %765 = vmatprep.subr.mxu0 %v388
    %766 = vmatpush1.msra.mxu0 %v387
    %767 = vmatprep.subr.mxu0 %v392
    %768 = vmatpush1.msra.mxu0 %v391
    %769 = vmatprep.subr.mxu0 %v396
    %770 = vmatpush1.msra.mxu0 %v395
    %771 = vmatprep.subr.mxu0 %v400
    %772 = vmatpush1.msra.mxu0 %v399
    %773 = vmatprep.subr.mxu0 %v404
    %774 = vmatpush1.msra.mxu0 %v403
    %775 = vmatprep.subr.mxu0 %v408
    %776 = vmatpush1.msra.mxu0 %v407
    %777 = vmatprep.subr.mxu0 %v412
    %778 = vmatpush1.msra.mxu0 %v411
    %779 = vmatprep.subr.mxu0 %v416
    %780 = vmatpush1.msra.mxu0 %v415
    %781 = vmatprep.subr.mxu0 %v420
    %782 = vmatpush1.msra.mxu0 %v419
    %783 = vmatprep.subr.mxu0 %v424
    %784 = vmatpush1.msra.mxu0 %v423
    %785 = vmatprep.subr.mxu0 %v428
    %786 = vmatpush1.msra.mxu0 %v427
    %787 = vmatprep.subr.mxu0 %v432
    %788 = vmatpush1.msra.mxu0 %v431
    %789 = vmatprep.subr.mxu0 %v436
    %790 = vmatpush1.msra.mxu0 %v435
    %791 = vmatprep.subr.mxu0 %v440
    %792 = vmatpush1.msra.mxu0 %v439
    %793 = vmatprep.subr.mxu0 %v444
    %794 = vmatpush1.msra.mxu0 %v443
    %795 = vmatprep.subr.mxu0 %v448
    %796 = vmatpush1.msra.mxu0 %v447
    %797 = vmatprep.subr.mxu0 %v452
    %798 = vmatpush1.msra.mxu0 %v451
    %799 = vmatprep.subr.mxu0 %v456
    %800 = vmatpush1.msra.mxu0 %v455
    %801 = vmatprep.subr.mxu0 %v460
    %802 = vmatpush1.msra.mxu0 %v459
    %803 = vmatprep.subr.mxu0 %v464
    %804 = vmatpush1.msra.mxu0 %v463
    %805 = vmatprep.subr.mxu0 %v468
    %806 = vmatpush1.msra.mxu0 %v467
    %807 = vmatprep.subr.mxu0 %v472
    %808 = vmatpush1.msra.mxu0 %v471
    %809 = vmatprep.mubr.f32.mxu0 %v88
    %810 = vmatmul.mubr.f32.gmra.mrb[0].mxu0 %v87
    %v811 = vpop.f32.mrb[0].mxu0
    %v812 = vadd.f32 %v741, %v811
    %v813 = vpop.f32.mrb[0].mxu0
    %v814 = vadd.f32 %v743, %v813
    %815 = vdwg.mxu0
    %816 = vmatprep.subr.mxu0 %v476
    %817 = vmatpush1.msra.mxu0 %v475
    %818 = vmatprep.subr.mxu0 %v480
    %819 = vmatpush1.msra.mxu0 %v479
    %820 = vmatprep.subr.mxu0 %v484
    %821 = vmatpush1.msra.mxu0 %v483
    %822 = vmatprep.subr.mxu0 %v488
    %823 = vmatpush1.msra.mxu0 %v487
    %824 = vmatprep.subr.mxu0 %v492
    %825 = vmatpush1.msra.mxu0 %v491
    %826 = vmatprep.subr.mxu0 %v496
    %827 = vmatpush1.msra.mxu0 %v495
    %828 = vmatprep.subr.mxu0 %v500
    %829 = vmatpush1.msra.mxu0 %v499
    %830 = vmatprep.subr.mxu0 %v504
    %831 = vmatpush1.msra.mxu0 %v503
    %832 = vmatprep.subr.mxu0 %v508
    %833 = vmatpush1.msra.mxu0 %v507
    %834 = vmatprep.subr.mxu0 %v512
    %835 = vmatpush1.msra.mxu0 %v511
    %836 = vmatprep.subr.mxu0 %v516
    %837 = vmatpush1.msra.mxu0 %v515
    %838 = vmatprep.subr.mxu0 %v520
    %839 = vmatpush1.msra.mxu0 %v519
    %840 = vmatprep.subr.mxu0 %v524
    %841 = vmatpush1.msra.mxu0 %v523
    %842 = vmatprep.subr.mxu0 %v528
    %843 = vmatpush1.msra.mxu0 %v527
    %844 = vmatprep.subr.mxu0 %v532
    %845 = vmatpush1.msra.mxu0 %v531
    %846 = vmatprep.subr.mxu0 %v536
    %847 = vmatpush1.msra.mxu0 %v535
    %848 = vmatprep.subr.mxu0 %v540
    %849 = vmatpush1.msra.mxu0 %v539
    %850 = vmatprep.subr.mxu0 %v544
    %851 = vmatpush1.msra.mxu0 %v543
    %852 = vmatprep.subr.mxu0 %v548
    %853 = vmatpush1.msra.mxu0 %v547
    %854 = vmatprep.subr.mxu0 %v552
    %855 = vmatpush1.msra.mxu0 %v551
    %856 = vmatprep.subr.mxu0 %v556
    %857 = vmatpush1.msra.mxu0 %v555
    %858 = vmatprep.subr.mxu0 %v560
    %859 = vmatpush1.msra.mxu0 %v559
    %860 = vmatprep.subr.mxu0 %v564
    %861 = vmatpush1.msra.mxu0 %v563
    %862 = vmatprep.subr.mxu0 %v568
    %863 = vmatpush1.msra.mxu0 %v567
    %864 = vmatprep.subr.mxu0 %v572
    %865 = vmatpush1.msra.mxu0 %v571
    %866 = vmatprep.subr.mxu0 %v576
    %867 = vmatpush1.msra.mxu0 %v575
    %868 = vmatprep.subr.mxu0 %v580
    %869 = vmatpush1.msra.mxu0 %v579
    %870 = vmatprep.subr.mxu0 %v584
    %871 = vmatpush1.msra.mxu0 %v583
    %872 = vmatprep.subr.mxu0 %v588
    %873 = vmatpush1.msra.mxu0 %v587
    %874 = vmatprep.subr.mxu0 %v592
    %875 = vmatpush1.msra.mxu0 %v591
    %876 = vmatprep.subr.mxu0 %v596
    %877 = vmatpush1.msra.mxu0 %v595
    %878 = vmatprep.subr.mxu0 %v600
    %879 = vmatpush1.msra.mxu0 %v599
    %880 = vmatprep.mubr.f32.mxu0 %v90
    %881 = vmatmul.mubr.f32.gmra.mrb[0].mxu0 %v89
    %v882 = vpop.f32.mrb[0].mxu0
    %v883 = vadd.f32 %v812, %v882
    %v884 = vpop.f32.mrb[0].mxu0
    %v885 = vadd.f32 %v814, %v884
    %886 = vdwg.mxu0
    %887 = vmatprep.subr.mxu0 %v94
    %888 = vmatpush1.msra.mxu0 %v93
    %889 = vmatprep.subr.mxu0 %v98
    %890 = vmatpush1.msra.mxu0 %v97
    %891 = vmatprep.subr.mxu0 %v102
    %892 = vmatpush1.msra.mxu0 %v101
    %893 = vmatprep.subr.mxu0 %v106
    %894 = vmatpush1.msra.mxu0 %v105
    %895 = vmatprep.subr.mxu0 %v110
    %896 = vmatpush1.msra.mxu0 %v109
    %897 = vmatprep.subr.mxu0 %v114
    %898 = vmatpush1.msra.mxu0 %v113
    %899 = vmatprep.subr.mxu0 %v118
    %900 = vmatpush1.msra.mxu0 %v117
    %901 = vmatprep.subr.mxu0 %v122
    %902 = vmatpush1.msra.mxu0 %v121
    %903 = vmatprep.subr.mxu0 %v126
    %904 = vmatpush1.msra.mxu0 %v125
    %905 = vmatprep.subr.mxu0 %v130
    %906 = vmatpush1.msra.mxu0 %v129
    %907 = vmatprep.subr.mxu0 %v134
    %908 = vmatpush1.msra.mxu0 %v133
    %909 = vmatprep.subr.mxu0 %v138
    %910 = vmatpush1.msra.mxu0 %v137
    %911 = vmatprep.subr.mxu0 %v142
    %912 = vmatpush1.msra.mxu0 %v141
    %913 = vmatprep.subr.mxu0 %v146
    %914 = vmatpush1.msra.mxu0 %v145
    %915 = vmatprep.subr.mxu0 %v150
    %916 = vmatpush1.msra.mxu0 %v149
    %917 = vmatprep.subr.mxu0 %v154
    %918 = vmatpush1.msra.mxu0 %v153
    %919 = vmatprep.subr.mxu0 %v158
    %920 = vmatpush1.msra.mxu0 %v157
    %921 = vmatprep.subr.mxu0 %v162
    %922 = vmatpush1.msra.mxu0 %v161
    %923 = vmatprep.subr.mxu0 %v166
    %924 = vmatpush1.msra.mxu0 %v165
    %925 = vmatprep.subr.mxu0 %v170
    %926 = vmatpush1.msra.mxu0 %v169
    %927 = vmatprep.subr.mxu0 %v174
    %928 = vmatpush1.msra.mxu0 %v173
    %929 = vmatprep.subr.mxu0 %v178
    %930 = vmatpush1.msra.mxu0 %v177
    %931 = vmatprep.subr.mxu0 %v182
    %932 = vmatpush1.msra.mxu0 %v181
    %933 = vmatprep.subr.mxu0 %v186
    %934 = vmatpush1.msra.mxu0 %v185
    %935 = vmatprep.subr.mxu0 %v190
    %936 = vmatpush1.msra.mxu0 %v189
    %937 = vmatprep.subr.mxu0 %v194
    %938 = vmatpush1.msra.mxu0 %v193
    %939 = vmatprep.subr.mxu0 %v198
    %940 = vmatpush1.msra.mxu0 %v197
    %941 = vmatprep.subr.mxu0 %v202
    %942 = vmatpush1.msra.mxu0 %v201
    %943 = vmatprep.subr.mxu0 %v206
    %944 = vmatpush1.msra.mxu0 %v205
    %945 = vmatprep.subr.mxu0 %v210
    %946 = vmatpush1.msra.mxu0 %v209
    %947 = vmatprep.subr.mxu0 %v214
    %948 = vmatpush1.msra.mxu0 %v213
    %949 = vmatprep.subr.mxu0 %v218
    %950 = vmatpush1.msra.mxu0 %v217
    %951 = vmatprep.mubr.f32.mxu0 %v84
    %952 = vmatmul.mubr.f32.gmra.mrb[0].mxu0 %v83
    %v953 = vpop.f32.mrb[0].mxu0
    %v954 = vadd.f32 0.0, %v953
    %v955 = vpop.f32.mrb[0].mxu0
    %v956 = vadd.f32 0.0, %v955
    %957 = vdwg.mxu0
    %958 = vmatprep.subr.mxu0 %v222
    %959 = vmatpush1.msra.mxu0 %v221
    %960 = vmatprep.subr.mxu0 %v226
    %961 = vmatpush1.msra.mxu0 %v225
    %962 = vmatprep.subr.mxu0 %v230
    %963 = vmatpush1.msra.mxu0 %v229
    %964 = vmatprep.subr.mxu0 %v234
    %965 = vmatpush1.msra.mxu0 %v233
    %966 = vmatprep.subr.mxu0 %v238
    %967 = vmatpush1.msra.mxu0 %v237
    %968 = vmatprep.subr.mxu0 %v242
    %969 = vmatpush1.msra.mxu0 %v241
    %970 = vmatprep.subr.mxu0 %v246
    %971 = vmatpush1.msra.mxu0 %v245
    %972 = vmatprep.subr.mxu0 %v250
    %973 = vmatpush1.msra.mxu0 %v249
    %974 = vmatprep.subr.mxu0 %v254
    %975 = vmatpush1.msra.mxu0 %v253
    %976 = vmatprep.subr.mxu0 %v258
    %977 = vmatpush1.msra.mxu0 %v257
    %978 = vmatprep.subr.mxu0 %v262
    %979 = vmatpush1.msra.mxu0 %v261
    %980 = vmatprep.subr.mxu0 %v266
    %981 = vmatpush1.msra.mxu0 %v265
    %982 = vmatprep.subr.mxu0 %v270
    %983 = vmatpush1.msra.mxu0 %v269
    %984 = vmatprep.subr.mxu0 %v274
    %985 = vmatpush1.msra.mxu0 %v273
    %986 = vmatprep.subr.mxu0 %v278
    %987 = vmatpush1.msra.mxu0 %v277
    %988 = vmatprep.subr.mxu0 %v282
    %989 = vmatpush1.msra.mxu0 %v281
    %990 = vmatprep.subr.mxu0 %v286
    %991 = vmatpush1.msra.mxu0 %v285
    %992 = vmatprep.subr.mxu0 %v290
    %993 = vmatpush1.msra.mxu0 %v289
    %994 = vmatprep.subr.mxu0 %v294
    %995 = vmatpush1.msra.mxu0 %v293
    %996 = vmatprep.subr.mxu0 %v298
    %997 = vmatpush1.msra.mxu0 %v297
    %998 = vmatprep.subr.mxu0 %v302
    %999 = vmatpush1.msra.mxu0 %v301
    %1000 = vmatprep.subr.mxu0 %v306
    %1001 = vmatpush1.msra.mxu0 %v305
    %1002 = vmatprep.subr.mxu0 %v310
    %1003 = vmatpush1.msra.mxu0 %v309
    %1004 = vmatprep.subr.mxu0 %v314
    %1005 = vmatpush1.msra.mxu0 %v313
    %1006 = vmatprep.subr.mxu0 %v318
    %1007 = vmatpush1.msra.mxu0 %v317
    %1008 = vmatprep.subr.mxu0 %v322
    %1009 = vmatpush1.msra.mxu0 %v321
    %1010 = vmatprep.subr.mxu0 %v326
    %1011 = vmatpush1.msra.mxu0 %v325
    %1012 = vmatprep.subr.mxu0 %v330
    %1013 = vmatpush1.msra.mxu0 %v329
    %1014 = vmatprep.subr.mxu0 %v334
    %1015 = vmatpush1.msra.mxu0 %v333
    %1016 = vmatprep.subr.mxu0 %v338
    %1017 = vmatpush1.msra.mxu0 %v337
    %1018 = vmatprep.subr.mxu0 %v342
    %1019 = vmatpush1.msra.mxu0 %v341
    %1020 = vmatprep.subr.mxu0 %v346
    %1021 = vmatpush1.msra.mxu0 %v345
    %1022 = vmatprep.mubr.f32.mxu0 %v86
    %1023 = vmatmul.mubr.f32.gmra.mrb[0].mxu0 %v85
    %v1024 = vpop.f32.mrb[0].mxu0
    %v1025 = vadd.f32 %v954, %v1024
    %v1026 = vpop.f32.mrb[0].mxu0
    %v1027 = vadd.f32 %v956, %v1026
    %1028 = vdwg.mxu0
    %1029 = vmatprep.subr.mxu0 %v350
    %1030 = vmatpush1.msra.mxu0 %v349
    %1031 = vmatprep.subr.mxu0 %v354
    %1032 = vmatpush1.msra.mxu0 %v353
    %1033 = vmatprep.subr.mxu0 %v358
    %1034 = vmatpush1.msra.mxu0 %v357
    %1035 = vmatprep.subr.mxu0 %v362
    %1036 = vmatpush1.msra.mxu0 %v361
    %1037 = vmatprep.subr.mxu0 %v366
    %1038 = vmatpush1.msra.mxu0 %v365
    %1039 = vmatprep.subr.mxu0 %v370
    %1040 = vmatpush1.msra.mxu0 %v369
    %1041 = vmatprep.subr.mxu0 %v374
    %1042 = vmatpush1.msra.mxu0 %v373
    %1043 = vmatprep.subr.mxu0 %v378
    %1044 = vmatpush1.msra.mxu0 %v377
    %1045 = vmatprep.subr.mxu0 %v382
    %1046 = vmatpush1.msra.mxu0 %v381
    %1047 = vmatprep.subr.mxu0 %v386
    %1048 = vmatpush1.msra.mxu0 %v385
    %1049 = vmatprep.subr.mxu0 %v390
    %1050 = vmatpush1.msra.mxu0 %v389
    %1051 = vmatprep.subr.mxu0 %v394
    %1052 = vmatpush1.msra.mxu0 %v393
    %1053 = vmatprep.subr.mxu0 %v398
    %1054 = vmatpush1.msra.mxu0 %v397
    %1055 = vmatprep.subr.mxu0 %v402
    %1056 = vmatpush1.msra.mxu0 %v401
    %1057 = vmatprep.subr.mxu0 %v406
    %1058 = vmatpush1.msra.mxu0 %v405
    %1059 = vmatprep.subr.mxu0 %v410
    %1060 = vmatpush1.msra.mxu0 %v409
    %1061 = vmatprep.subr.mxu0 %v414
    %1062 = vmatpush1.msra.mxu0 %v413
    %1063 = vmatprep.subr.mxu0 %v418
    %1064 = vmatpush1.msra.mxu0 %v417
    %1065 = vmatprep.subr.mxu0 %v422
    %1066 = vmatpush1.msra.mxu0 %v421
    %1067 = vmatprep.subr.mxu0 %v426
    %1068 = vmatpush1.msra.mxu0 %v425
    %1069 = vmatprep.subr.mxu0 %v430
    %1070 = vmatpush1.msra.mxu0 %v429
    %1071 = vmatprep.subr.mxu0 %v434
    %1072 = vmatpush1.msra.mxu0 %v433
    %1073 = vmatprep.subr.mxu0 %v438
    %1074 = vmatpush1.msra.mxu0 %v437
    %1075 = vmatprep.subr.mxu0 %v442
    %1076 = vmatpush1.msra.mxu0 %v441
    %1077 = vmatprep.subr.mxu0 %v446
    %1078 = vmatpush1.msra.mxu0 %v445
    %1079 = vmatprep.subr.mxu0 %v450
    %1080 = vmatpush1.msra.mxu0 %v449
    %1081 = vmatprep.subr.mxu0 %v454
    %1082 = vmatpush1.msra.mxu0 %v453
    %1083 = vmatprep.subr.mxu0 %v458
    %1084 = vmatpush1.msra.mxu0 %v457
    %1085 = vmatprep.subr.mxu0 %v462
    %1086 = vmatpush1.msra.mxu0 %v461
    %1087 = vmatprep.subr.mxu0 %v466
    %1088 = vmatpush1.msra.mxu0 %v465
    %1089 = vmatprep.subr.mxu0 %v470
    %1090 = vmatpush1.msra.mxu0 %v469
    %1091 = vmatprep.subr.mxu0 %v474
    %1092 = vmatpush1.msra.mxu0 %v473
    %1093 = vmatprep.mubr.f32.mxu0 %v88
    %1094 = vmatmul.mubr.f32.gmra.mrb[0].mxu0 %v87
    %v1095 = vpop.f32.mrb[0].mxu0
    %v1096 = vadd.f32 %v1025, %v1095
    %v1097 = vpop.f32.mrb[0].mxu0
    %v1098 = vadd.f32 %v1027, %v1097
    %1099 = vdwg.mxu0
    %1100 = vmatprep.subr.mxu0 %v478
    %1101 = vmatpush1.msra.mxu0 %v477
    %1102 = vmatprep.subr.mxu0 %v482
    %1103 = vmatpush1.msra.mxu0 %v481
    %1104 = vmatprep.subr.mxu0 %v486
    %1105 = vmatpush1.msra.mxu0 %v485
    %1106 = vmatprep.subr.mxu0 %v490
    %1107 = vmatpush1.msra.mxu0 %v489
    %1108 = vmatprep.subr.mxu0 %v494
    %1109 = vmatpush1.msra.mxu0 %v493
    %1110 = vmatprep.subr.mxu0 %v498
    %1111 = vmatpush1.msra.mxu0 %v497
    %1112 = vmatprep.subr.mxu0 %v502
    %1113 = vmatpush1.msra.mxu0 %v501
    %1114 = vmatprep.subr.mxu0 %v506
    %1115 = vmatpush1.msra.mxu0 %v505
    %1116 = vmatprep.subr.mxu0 %v510
    %1117 = vmatpush1.msra.mxu0 %v509
    %1118 = vmatprep.subr.mxu0 %v514
    %1119 = vmatpush1.msra.mxu0 %v513
    %1120 = vmatprep.subr.mxu0 %v518
    %1121 = vmatpush1.msra.mxu0 %v517
    %1122 = vmatprep.subr.mxu0 %v522
    %1123 = vmatpush1.msra.mxu0 %v521
    %1124 = vmatprep.subr.mxu0 %v526
    %1125 = vmatpush1.msra.mxu0 %v525
    %1126 = vmatprep.subr.mxu0 %v530
    %1127 = vmatpush1.msra.mxu0 %v529
    %1128 = vmatprep.subr.mxu0 %v534
    %1129 = vmatpush1.msra.mxu0 %v533
    %1130 = vmatprep.subr.mxu0 %v538
    %1131 = vmatpush1.msra.mxu0 %v537
    %1132 = vmatprep.subr.mxu0 %v542
    %1133 = vmatpush1.msra.mxu0 %v541
    %1134 = vmatprep.subr.mxu0 %v546
    %1135 = vmatpush1.msra.mxu0 %v545
    %1136 = vmatprep.subr.mxu0 %v550
    %1137 = vmatpush1.msra.mxu0 %v549
    %1138 = vmatprep.subr.mxu0 %v554
    %1139 = vmatpush1.msra.mxu0 %v553
    %1140 = vmatprep.subr.mxu0 %v558
    %1141 = vmatpush1.msra.mxu0 %v557
    %1142 = vmatprep.subr.mxu0 %v562
    %1143 = vmatpush1.msra.mxu0 %v561
    %1144 = vmatprep.subr.mxu0 %v566
    %1145 = vmatpush1.msra.mxu0 %v565
    %1146 = vmatprep.subr.mxu0 %v570
    %1147 = vmatpush1.msra.mxu0 %v569
    %1148 = vmatprep.subr.mxu0 %v574
    %1149 = vmatpush1.msra.mxu0 %v573
    %1150 = vmatprep.subr.mxu0 %v578
    %1151 = vmatpush1.msra.mxu0 %v577
    %1152 = vmatprep.subr.mxu0 %v582
    %1153 = vmatpush1.msra.mxu0 %v581
    %1154 = vmatprep.subr.mxu0 %v586
    %1155 = vmatpush1.msra.mxu0 %v585
    %1156 = vmatprep.subr.mxu0 %v590
    %1157 = vmatpush1.msra.mxu0 %v589
    %1158 = vmatprep.subr.mxu0 %v594
    %1159 = vmatpush1.msra.mxu0 %v593
    %1160 = vmatprep.subr.mxu0 %v598
    %1161 = vmatpush1.msra.mxu0 %v597
    %1162 = vmatprep.subr.mxu0 %v602
    %1163 = vmatpush1.msra.mxu0 %v601
    %1164 = vmatprep.mubr.f32.mxu0 %v90
    %1165 = vmatmul.mubr.f32.gmra.mrb[0].mxu0 %v89
    %v1166 = vpop.f32.mrb[0].mxu0
    %v1167 = vadd.f32 %v1096, %v1166
    %v1168 = vpop.f32.mrb[0].mxu0
    %v1169 = vadd.f32 %v1098, %v1168
    %1170 = vdwg.mxu0
    %v1171 = vadd.f32 %v79, %v883
    %v1172 = vadd.f32 %v80, %v885
    %v1173 = vadd.f32 %v81, %v1167
    %v1174 = vadd.f32 %v82, %v1169
    %1175 = vst [vmem:[#allocation2] sm:$0xff] %v1171
    %1176 = vst [vmem:[#allocation2 + $0x8] sm:$0xff] %v1172
    %1177 = vst [vmem:[#allocation2 + $0x10] sm:$0xff] %v1173
    %1178 = vst [vmem:[#allocation2 + $0x18] sm:$0xff] %v1174
    // Predicated region
    $region42: #{fc_representation_forward.1} parent=1 // pred_check
      %p1179 = pneg %p71
    $region43: #{fc_representation_forward.1} parent=1 // pred_check_branch
      %1181 = sbr.rel (%p1179) target = $region45
    $region44: #{fc_representation_forward.1} parent=1 // pred_region
      %v1182 = vld [vmem:[#allocation2] sm:$0xff]
      %v1183 = vld [vmem:[#allocation2 + $0x8] sm:$0xff]
      %v1184 = vld [vmem:[#allocation2 + $0x10] sm:$0xff]
      %v1185 = vld [vmem:[#allocation2 + $0x18] sm:$0xff]
      %v1186 = vld [vmem:[#allocation5] sm:$0xf]
      %v1188 = vlaneseq
      %v1189 = vshrl.u32 %v1188, 7
      %v1190 = vsub.s32 0, %v1189
      %v1191 = vrot.slane %v1186, %v1190
      %v1192 = vlaneseq
      %v1193 = vshrl.u32 %v1192, 7
      %v1194 = vsub.s32 1, %v1193
      %v1195 = vrot.slane %v1186, %v1194
      %v1196 = vlaneseq
      %v1197 = vshrl.u32 %v1196, 7
      %v1198 = vsub.s32 2, %v1197
      %v1199 = vrot.slane %v1186, %v1198
      %v1200 = vlaneseq
      %v1201 = vshrl.u32 %v1200, 7
      %v1202 = vsub.s32 3, %v1201
      %v1203 = vrot.slane %v1186, %v1202
      %v1208 = vadd.f32 %v1182, %v1191
      %v1209 = vadd.f32 %v1183, %v1195
      %v1210 = vadd.f32 %v1184, %v1199
      %v1211 = vadd.f32 %v1185, %v1203
      %v1212 = vmax.f32 %v1208, 0.0
      %v1213 = vmax.f32 %v1209, 0.0
      %v1214 = vmax.f32 %v1210, 0.0
      %v1215 = vmax.f32 %v1211, 0.0
      %v1216 = vld [vmem:[#allocation7] sm:$0xff]
      %v1217 = vld [vmem:[#allocation7 + $0x8] sm:$0xff]
      %v1218 = vld [vmem:[#allocation7 + $0x10] sm:$0xff]
      %v1219 = vld [vmem:[#allocation7 + $0x18] sm:$0xff]
      %v1220 = vld [vmem:[#allocation7 + $0x20] sm:$0xff]
      %v1221 = vld [vmem:[#allocation7 + $0x28] sm:$0xff]
      %v1222 = vld [vmem:[#allocation7 + $0x30] sm:$0xff]
      %v1223 = vld [vmem:[#allocation7 + $0x38] sm:$0xff]
      %v1224 = vld [vmem:[#allocation7 + $0x40] sm:$0xff]
      %v1225 = vld [vmem:[#allocation7 + $0x48] sm:$0xff]
      %v1226 = vld [vmem:[#allocation7 + $0x50] sm:$0xff]
      %v1227 = vld [vmem:[#allocation7 + $0x58] sm:$0xff]
      %v1228 = vld [vmem:[#allocation7 + $0x60] sm:$0xff]
      %v1229 = vld [vmem:[#allocation7 + $0x68] sm:$0xff]
      %v1230 = vld [vmem:[#allocation7 + $0x70] sm:$0xff]
      %v1231 = vld [vmem:[#allocation7 + $0x78] sm:$0xff]
      %v1232 = vld [vmem:[#allocation7 + $0x80] sm:$0xff]
      %v1233 = vld [vmem:[#allocation7 + $0x88] sm:$0xff]
      %v1234 = vld [vmem:[#allocation7 + $0x90] sm:$0xff]
      %v1235 = vld [vmem:[#allocation7 + $0x98] sm:$0xff]
      %v1236 = vld [vmem:[#allocation7 + $0xa0] sm:$0xff]
      %v1237 = vld [vmem:[#allocation7 + $0xa8] sm:$0xff]
      %v1238 = vld [vmem:[#allocation7 + $0xb0] sm:$0xff]
      %v1239 = vld [vmem:[#allocation7 + $0xb8] sm:$0xff]
      %v1240 = vld [vmem:[#allocation7 + $0xc0] sm:$0xff]
      %v1241 = vld [vmem:[#allocation7 + $0xc8] sm:$0xff]
      %v1242 = vld [vmem:[#allocation7 + $0xd0] sm:$0xff]
      %v1243 = vld [vmem:[#allocation7 + $0xd8] sm:$0xff]
      %v1244 = vld [vmem:[#allocation7 + $0xe0] sm:$0xff]
      %v1245 = vld [vmem:[#allocation7 + $0xe8] sm:$0xff]
      %v1246 = vld [vmem:[#allocation7 + $0xf0] sm:$0xff]
      %v1247 = vld [vmem:[#allocation7 + $0xf8] sm:$0xff]
      %v1248 = vld [vmem:[#allocation7 + $0x100] sm:$0xff]
      %v1249 = vld [vmem:[#allocation7 + $0x108] sm:$0xff]
      %v1250 = vld [vmem:[#allocation7 + $0x110] sm:$0xff]
      %v1251 = vld [vmem:[#allocation7 + $0x118] sm:$0xff]
      %v1252 = vld [vmem:[#allocation7 + $0x120] sm:$0xff]
      %v1253 = vld [vmem:[#allocation7 + $0x128] sm:$0xff]
      %v1254 = vld [vmem:[#allocation7 + $0x130] sm:$0xff]
      %v1255 = vld [vmem:[#allocation7 + $0x138] sm:$0xff]
      %v1256 = vld [vmem:[#allocation7 + $0x140] sm:$0xff]
      %v1257 = vld [vmem:[#allocation7 + $0x148] sm:$0xff]
      %v1258 = vld [vmem:[#allocation7 + $0x150] sm:$0xff]
      %v1259 = vld [vmem:[#allocation7 + $0x158] sm:$0xff]
      %v1260 = vld [vmem:[#allocation7 + $0x160] sm:$0xff]
      %v1261 = vld [vmem:[#allocation7 + $0x168] sm:$0xff]
      %v1262 = vld [vmem:[#allocation7 + $0x170] sm:$0xff]
      %v1263 = vld [vmem:[#allocation7 + $0x178] sm:$0xff]
      %v1264 = vld [vmem:[#allocation7 + $0x180] sm:$0xff]
      %v1265 = vld [vmem:[#allocation7 + $0x188] sm:$0xff]
      %v1266 = vld [vmem:[#allocation7 + $0x190] sm:$0xff]
      %v1267 = vld [vmem:[#allocation7 + $0x198] sm:$0xff]
      %v1268 = vld [vmem:[#allocation7 + $0x1a0] sm:$0xff]
      %v1269 = vld [vmem:[#allocation7 + $0x1a8] sm:$0xff]
      %v1270 = vld [vmem:[#allocation7 + $0x1b0] sm:$0xff]
      %v1271 = vld [vmem:[#allocation7 + $0x1b8] sm:$0xff]
      %v1272 = vld [vmem:[#allocation7 + $0x1c0] sm:$0xff]
      %v1273 = vld [vmem:[#allocation7 + $0x1c8] sm:$0xff]
      %v1274 = vld [vmem:[#allocation7 + $0x1d0] sm:$0xff]
      %v1275 = vld [vmem:[#allocation7 + $0x1d8] sm:$0xff]
      %v1276 = vld [vmem:[#allocation7 + $0x1e0] sm:$0xff]
      %v1277 = vld [vmem:[#allocation7 + $0x1e8] sm:$0xff]
      %v1278 = vld [vmem:[#allocation7 + $0x1f0] sm:$0xff]
      %v1279 = vld [vmem:[#allocation7 + $0x1f8] sm:$0xff]
      %v1280 = vld [vmem:[#allocation8] sm:$0x1]
      %v1282 = vlaneseq
      %v1283 = vshrl.u32 %v1282, 7
      %v1284 = vsub.s32 0, %v1283
      %v1285 = vrot.slane %v1280, %v1284
      %1287 = vmatprep.subr.mxu0 0.0
      %1288 = vmatpush1.msra.mxu0 %v1216
      %1289 = vmatprep.subr.mxu0 0.0
      %1290 = vmatpush1.msra.mxu0 %v1217
      %1291 = vmatprep.subr.mxu0 0.0
      %1292 = vmatpush1.msra.mxu0 %v1218
      %1293 = vmatprep.subr.mxu0 0.0
      %1294 = vmatpush1.msra.mxu0 %v1219
      %1295 = vmatprep.subr.mxu0 0.0
      %1296 = vmatpush1.msra.mxu0 %v1220
      %1297 = vmatprep.subr.mxu0 0.0
      %1298 = vmatpush1.msra.mxu0 %v1221
      %1299 = vmatprep.subr.mxu0 0.0
      %1300 = vmatpush1.msra.mxu0 %v1222
      %1301 = vmatprep.subr.mxu0 0.0
      %1302 = vmatpush1.msra.mxu0 %v1223
      %1303 = vmatprep.subr.mxu0 0.0
      %1304 = vmatpush1.msra.mxu0 %v1224
      %1305 = vmatprep.subr.mxu0 0.0
      %1306 = vmatpush1.msra.mxu0 %v1225
      %1307 = vmatprep.subr.mxu0 0.0
      %1308 = vmatpush1.msra.mxu0 %v1226
      %1309 = vmatprep.subr.mxu0 0.0
      %1310 = vmatpush1.msra.mxu0 %v1227
      %1311 = vmatprep.subr.mxu0 0.0
      %1312 = vmatpush1.msra.mxu0 %v1228
      %1313 = vmatprep.subr.mxu0 0.0
      %1314 = vmatpush1.msra.mxu0 %v1229
      %1315 = vmatprep.subr.mxu0 0.0
      %1316 = vmatpush1.msra.mxu0 %v1230
      %1317 = vmatprep.subr.mxu0 0.0
      %1318 = vmatpush1.msra.mxu0 %v1231
      %1319 = vmatprep.subr.mxu0 0.0
      %1320 = vmatpush1.msra.mxu0 %v1232
      %1321 = vmatprep.subr.mxu0 0.0
      %1322 = vmatpush1.msra.mxu0 %v1233
      %1323 = vmatprep.subr.mxu0 0.0
      %1324 = vmatpush1.msra.mxu0 %v1234
      %1325 = vmatprep.subr.mxu0 0.0
      %1326 = vmatpush1.msra.mxu0 %v1235
      %1327 = vmatprep.subr.mxu0 0.0
      %1328 = vmatpush1.msra.mxu0 %v1236
      %1329 = vmatprep.subr.mxu0 0.0
      %1330 = vmatpush1.msra.mxu0 %v1237
      %1331 = vmatprep.subr.mxu0 0.0
      %1332 = vmatpush1.msra.mxu0 %v1238
      %1333 = vmatprep.subr.mxu0 0.0
      %1334 = vmatpush1.msra.mxu0 %v1239
      %1335 = vmatprep.subr.mxu0 0.0
      %1336 = vmatpush1.msra.mxu0 %v1240
      %1337 = vmatprep.subr.mxu0 0.0
      %1338 = vmatpush1.msra.mxu0 %v1241
      %1339 = vmatprep.subr.mxu0 0.0
      %1340 = vmatpush1.msra.mxu0 %v1242
      %1341 = vmatprep.subr.mxu0 0.0
      %1342 = vmatpush1.msra.mxu0 %v1243
      %1343 = vmatprep.subr.mxu0 0.0
      %1344 = vmatpush1.msra.mxu0 %v1244
      %1345 = vmatprep.subr.mxu0 0.0
      %1346 = vmatpush1.msra.mxu0 %v1245
      %1347 = vmatprep.subr.mxu0 0.0
      %1348 = vmatpush1.msra.mxu0 %v1246
      %1349 = vmatprep.subr.mxu0 0.0
      %1350 = vmatpush1.msra.mxu0 %v1247
      %1351 = vmatprep.mubr.f32.mxu0 %v1213
      %1352 = vmatmul.mubr.f32.gmra.mrb[0].mxu0 %v1212
      %v1353 = vpop.f32.mrb[0].mxu0
      %v1354 = vadd.f32 %v1285, %v1353
      %v1355 = vpop.f32.mrb[0].mxu0
      %1356 = vdwg.mxu0
      %1357 = vmatprep.subr.mxu0 0.0
      %1358 = vmatpush1.msra.mxu0 %v1248
      %1359 = vmatprep.subr.mxu0 0.0
      %1360 = vmatpush1.msra.mxu0 %v1249
      %1361 = vmatprep.subr.mxu0 0.0
      %1362 = vmatpush1.msra.mxu0 %v1250
      %1363 = vmatprep.subr.mxu0 0.0
      %1364 = vmatpush1.msra.mxu0 %v1251
      %1365 = vmatprep.subr.mxu0 0.0
      %1366 = vmatpush1.msra.mxu0 %v1252
      %1367 = vmatprep.subr.mxu0 0.0
      %1368 = vmatpush1.msra.mxu0 %v1253
      %1369 = vmatprep.subr.mxu0 0.0
      %1370 = vmatpush1.msra.mxu0 %v1254
      %1371 = vmatprep.subr.mxu0 0.0
      %1372 = vmatpush1.msra.mxu0 %v1255
      %1373 = vmatprep.subr.mxu0 0.0
      %1374 = vmatpush1.msra.mxu0 %v1256
      %1375 = vmatprep.subr.mxu0 0.0
      %1376 = vmatpush1.msra.mxu0 %v1257
      %1377 = vmatprep.subr.mxu0 0.0
      %1378 = vmatpush1.msra.mxu0 %v1258
      %1379 = vmatprep.subr.mxu0 0.0
      %1380 = vmatpush1.msra.mxu0 %v1259
      %1381 = vmatprep.subr.mxu0 0.0
      %1382 = vmatpush1.msra.mxu0 %v1260
      %1383 = vmatprep.subr.mxu0 0.0
      %1384 = vmatpush1.msra.mxu0 %v1261
      %1385 = vmatprep.subr.mxu0 0.0
      %1386 = vmatpush1.msra.mxu0 %v1262
      %1387 = vmatprep.subr.mxu0 0.0
      %1388 = vmatpush1.msra.mxu0 %v1263
      %1389 = vmatprep.subr.mxu0 0.0
      %1390 = vmatpush1.msra.mxu0 %v1264
      %1391 = vmatprep.subr.mxu0 0.0
      %1392 = vmatpush1.msra.mxu0 %v1265
      %1393 = vmatprep.subr.mxu0 0.0
      %1394 = vmatpush1.msra.mxu0 %v1266
      %1395 = vmatprep.subr.mxu0 0.0
      %1396 = vmatpush1.msra.mxu0 %v1267
      %1397 = vmatprep.subr.mxu0 0.0
      %1398 = vmatpush1.msra.mxu0 %v1268
      %1399 = vmatprep.subr.mxu0 0.0
      %1400 = vmatpush1.msra.mxu0 %v1269
      %1401 = vmatprep.subr.mxu0 0.0
      %1402 = vmatpush1.msra.mxu0 %v1270
      %1403 = vmatprep.subr.mxu0 0.0
      %1404 = vmatpush1.msra.mxu0 %v1271
      %1405 = vmatprep.subr.mxu0 0.0
      %1406 = vmatpush1.msra.mxu0 %v1272
      %1407 = vmatprep.subr.mxu0 0.0
      %1408 = vmatpush1.msra.mxu0 %v1273
      %1409 = vmatprep.subr.mxu0 0.0
      %1410 = vmatpush1.msra.mxu0 %v1274
      %1411 = vmatprep.subr.mxu0 0.0
      %1412 = vmatpush1.msra.mxu0 %v1275
      %1413 = vmatprep.subr.mxu0 0.0
      %1414 = vmatpush1.msra.mxu0 %v1276
      %1415 = vmatprep.subr.mxu0 0.0
      %1416 = vmatpush1.msra.mxu0 %v1277
      %1417 = vmatprep.subr.mxu0 0.0
      %1418 = vmatpush1.msra.mxu0 %v1278
      %1419 = vmatprep.subr.mxu0 0.0
      %1420 = vmatpush1.msra.mxu0 %v1279
      %1421 = vmatprep.mubr.f32.mxu0 %v1215
      %1422 = vmatmul.mubr.f32.gmra.mrb[0].mxu0 %v1214
      %v1423 = vpop.f32.mrb[0].mxu0
      %v1424 = vadd.f32 %v1354, %v1423
      %v1425 = vpop.f32.mrb[0].mxu0
      %1426 = vdwg.mxu0
      %1427 = vst [vmem:[%s5] sm:$0xff] %v1424
    $region45: #{fc_representation_forward.1} parent=1 // pred_fallthru
      _
    // Predicated region
    $region46: #{fc_representation_forward.1} parent=1 // pred_check
      _
    $region47: #{fc_representation_forward.1} parent=1 // pred_check_branch
      %1429 = sbr.rel (0) target = $region49
    $region48: #{fc_representation_forward.1} parent=1 // pred_region
      _
    $region49: #{fc_representation_forward.1} parent=1 // pred_fallthru
      _
    // Predicated region
    $region50: #{fc_representation_forward.1} parent=1 // pred_check
      _
    $region51: #{fc_representation_forward.1} parent=1 // pred_check_branch
      %1431 = sbr.rel (0) target = $region53
    $region52: #{fc_representation_forward.1} parent=1 // pred_region
      _
    $region53: #{fc_representation_forward.1} parent=1 // pred_fallthru
      _
    %1432 = vsyncpa [#allocation4], 1
    %1433 = vsyncpa [#allocation6], 1
    %1434 = vsyncpa [#allocation9], 1

</llo_original>
